<compile_context>
chip_gen: v6e
topology: v6e:2x2x1
jax: 0.10.0
libtpu: 0.0.40
codegen_flags: <defaults>
</compile_context>

<pallas_src>
import functools

import jax
import jax.numpy as jnp
from jax.experimental import pallas as pl
from jax.experimental.pallas import tpu as pltpu


def _custom_softmax_feature_major(y, sections, onehot_dim):
    """CustomSoftMax on a feature-major f32 tile y: [n_features, batch_tile].

    Mask-based (no unaligned slices, no concat): per-section softmax over the
    first `onehot_dim` rows, tanh on the remaining rows.  One exp over the
    full block; exact per-section reciprocal on [1, TB] rows.
    """
    row = jax.lax.broadcasted_iota(jnp.int32, y.shape, 0)

    # Per-row section max, scattered via static masks (init = y so rows
    # outside any section see exp(0) and can never overflow).
    m_rows = y
    masks = []
    start = 0
    for w in sections:  # static Python loop over static section widths
        mask = jnp.logical_and(row >= start, row < start + w)
        masks.append(mask)
        m_s = jnp.max(jnp.where(mask, y, -jnp.inf), axis=0, keepdims=True)
        m_rows = jnp.where(mask, m_s, m_rows)
        start += w

    e = jnp.exp(y - m_rows)                       # single EUP pass, full block

    # Exact per-section reciprocal of the denominator ([1, TB] each), scattered
    # back to the section rows.
    r_rows = jnp.ones_like(y)
    for mask in masks:
        d_s = jnp.sum(jnp.where(mask, e, 0.0), axis=0, keepdims=True)
        r_rows = jnp.where(mask, 1.0 / d_s, r_rows)

    return jnp.where(row < onehot_dim, e * r_rows, jnp.tanh(y))


def _fused_policy_transition_kernel(
        x_ref,                                             # [TB, n_state] batch-major block
        pw1_ref, pb1_ref, pw2_ref, pb2_ref,                # policy net (pre-transposed)
        tw1s_ref, tw1a_ref, tb1_ref, tw2_ref, tb2_ref,     # transition net (pre-transposed, W1 split)
        act_ref, st_ref,                                   # feature-major outputs [n_action, TB], [n_state, TB]
        *, action_sections, n_onehot_action,
        state_sections, n_onehot_state, neg_slope):
    # One in-kernel transpose (XLU slot) -> feature-major [n_state, TB]; the
    # wrapper no longer relayouts anything in XLA.
    x = jnp.transpose(x_ref[...])

    # ---- policy_net: Linear -> LeakyReLU -> Linear -> CustomSoftMax ----
    h = jnp.dot(pw1_ref[...], x, preferred_element_type=jnp.float32) + pb1_ref[...]
    h = jnp.where(h >= 0.0, h, neg_slope * h)              # f32 elementwise (v5e-safe)
    y = jnp.dot(pw2_ref[...], h.astype(pw2_ref.dtype),
                preferred_element_type=jnp.float32) + pb2_ref[...]
    action = _custom_softmax_feature_major(y, action_sections, n_onehot_action)
    act_ref[...] = action.astype(act_ref.dtype)

    # ---- transition_net on cat([state, action]) via two dots (no concat) ----
    # TODO(synk): could fuse into a single K=n_state+n_action dot; kernel is not
    # MXU-slot-bound at these sizes, so kept as two dots.
    ht = (jnp.dot(tw1s_ref[...], x, preferred_element_type=jnp.float32)
          + jnp.dot(tw1a_ref[...], action.astype(tw1a_ref.dtype),
                    preferred_element_type=jnp.float32)
          + tb1_ref[...])
    ht = jnp.where(ht >= 0.0, ht, neg_slope * ht)
    yt = jnp.dot(tw2_ref[...], ht.astype(tw2_ref.dtype),
                 preferred_element_type=jnp.float32) + tb2_ref[...]
    st_ref[...] = _custom_softmax_feature_major(
        yt, state_sections, n_onehot_state).astype(st_ref.dtype)


def prepare_params(p_w1, p_b1, p_w2, p_b2, t_w1, t_b1, t_w2, t_b2, *,
                   n_state, matmul_dtype=jnp.float32):
    """One-time parameter preprocessing (hoisted out of the forward path).

    Weights come in nn.Linear's effective [in, out] layout (math is x @ W + b).
    Returns weights transposed to [out, in], the transition first layer split
    into state/action halves, and biases as [out, 1] columns, cast to
    `matmul_dtype` (bf16 halves DMA bytes on v6e/v7x; keep f32 for tight
    numerical checks)."""
    H_p = p_w1.shape[1]
    n_action = p_w2.shape[1]
    H_t = t_w1.shape[1]
    assert p_w1.shape[0] == n_state
    assert t_w1.shape[0] == n_state + n_action
    assert t_w2.shape[1] == n_state

    pw1t = jnp.transpose(p_w1).astype(matmul_dtype)             # [H_p, n_state]
    pw2t = jnp.transpose(p_w2).astype(matmul_dtype)             # [n_action, H_p]
    tw1s = jnp.transpose(t_w1[:n_state, :]).astype(matmul_dtype)  # [H_t, n_state]
    tw1a = jnp.transpose(t_w1[n_state:, :]).astype(matmul_dtype)  # [H_t, n_action]
    tw2t = jnp.transpose(t_w2).astype(matmul_dtype)             # [n_state, H_t]
    pb1 = jnp.reshape(p_b1, (H_p, 1)).astype(jnp.float32)
    pb2 = jnp.reshape(p_b2, (n_action, 1)).astype(jnp.float32)
    tb1 = jnp.reshape(t_b1, (H_t, 1)).astype(jnp.float32)
    tb2 = jnp.reshape(t_b2, (n_state, 1)).astype(jnp.float32)
    return (pw1t, pb1, pw2t, pb2, tw1s, tw1a, tb1, tw2t, tb2)


def _auto_batch_tile(B, max_tile):
    """Largest lane tile the batch allows, but >= 2 grid steps when possible
    so both v7x TensorCores get work (v5e/v6e: simply a big tile)."""
    Bp = 128 * pl.cdiv(B, 128)
    if Bp <= 128:
        return Bp
    return int(min(max_tile, 128 * pl.cdiv(Bp, 2 * 128)))


def policy_transition_forward(state, params, *,
                              action_sections, n_onehot_action,
                              state_sections, n_onehot_state,
                              neg_slope=0.01, batch_tile=None,
                              max_batch_tile=4096, batch_major_out=False):
    """Fused policy + transition forward in a single Pallas kernel.

    state:  [B, n_state] batch-major (no wrapper relayout).
    params: output of prepare_params().
    Returns feature-major (action [n_action, B], next_state [n_state, B]) by
    default -- keep this layout end-to-end to avoid relayout traffic; pass
    batch_major_out=True for the original module's [B, features] layout.
    """
    (pw1t, pb1, pw2t, pb2, tw1s, tw1a, tb1, tw2t, tb2) = params
    B, n_state = state.shape
    H_p = pw1t.shape[0]
    n_action = pw2t.shape[0]
    H_t = tw1s.shape[0]
    assert pw1t.shape == (H_p, n_state)
    assert tw1a.shape == (H_t, n_action)
    assert tw2t.shape == (n_state, H_t)
    assert sum(action_sections) == n_onehot_action, "action sections != onehot_action_dim"
    assert sum(state_sections) == n_onehot_state, "state sections != onehot_state_dim"

    if batch_tile is None:
        batch_tile = _auto_batch_tile(B, max_batch_tile)
    Bp = batch_tile * pl.cdiv(B, batch_tile)
    x = state.astype(pw1t.dtype)        # no-op for the default f32 path
    if Bp != B:
        x = jnp.pad(x, ((0, Bp - B), (0, 0)))

    kernel = functools.partial(
        _fused_policy_transition_kernel,
        action_sections=tuple(action_sections),
        n_onehot_action=n_onehot_action,
        state_sections=tuple(state_sections),
        n_onehot_state=n_onehot_state,
        neg_slope=neg_slope,
    )

    batch_in_blk = lambda i: (i, 0)     # batch-major input: tile over rows
    batch_out_blk = lambda i: (0, i)    # feature-major outputs: tile over lanes
    const_blk = lambda i: (0, 0)        # weights / biases resident across grid steps

    act_fm, st_fm = pl.pallas_call(
        kernel,
        out_shape=(jax.ShapeDtypeStruct((n_action, Bp), jnp.float32),
                   jax.ShapeDtypeStruct((n_state, Bp), jnp.float32)),
        grid_spec=pltpu.PrefetchScalarGridSpec(
            num_scalar_prefetch=0,
            grid=(Bp // batch_tile,),
            in_specs=[
                pl.BlockSpec((batch_tile, n_state), batch_in_blk),  # x (batch-major)
                pl.BlockSpec((H_p, n_state), const_blk),            # policy W1^T
                pl.BlockSpec((H_p, 1), const_blk),                  # policy b1
                pl.BlockSpec((n_action, H_p), const_blk),           # policy W2^T
                pl.BlockSpec((n_action, 1), const_blk),             # policy b2
                pl.BlockSpec((H_t, n_state), const_blk),            # transition W1^T (state half)
                pl.BlockSpec((H_t, n_action), const_blk),           # transition W1^T (action half)
                pl.BlockSpec((H_t, 1), const_blk),                  # transition b1
                pl.BlockSpec((n_state, H_t), const_blk),            # transition W2^T
                pl.BlockSpec((n_state, 1), const_blk),              # transition b2
            ],
            out_specs=(
                pl.BlockSpec((n_action, batch_tile), batch_out_blk),
                pl.BlockSpec((n_state, batch_tile), batch_out_blk),
            ),
        ),
        compiler_params=pltpu.CompilerParams(
            dimension_semantics=("parallel",),        # shard batch axis across TCs (v7x)
            vmem_limit_bytes=32 * 1024 * 1024,        # explicit, v7x-safe; tiles nowhere near it
        ),
    )(x, pw1t, pb1, pw2t, pb2, tw1s, tw1a, tb1, tw2t, tb2)

    if Bp != B:
        act_fm = act_fm[:, :B]
        st_fm = st_fm[:, :B]
    if batch_major_out:
        return jnp.transpose(act_fm), jnp.transpose(st_fm)
    return act_fm, st_fm


def _reference_mlp(x, w1, b1, w2, b2, sections, onehot_dim, neg_slope=0.01):
    """Plain-JAX reference: Linear -> LeakyReLU -> Linear -> CustomSoftMax."""
    h = x @ w1 + b1
    h = jnp.where(h >= 0.0, h, neg_slope * h)
    y = h @ w2 + b2
    parts = []
    start = 0
    for w in sections:
        parts.append(jax.nn.softmax(y[:, start:start + w], axis=-1))
        start += w
    parts.append(jnp.tanh(y[:, onehot_dim:]))
    return jnp.concatenate(parts, axis=-1)


if __name__ == "__main__":
    # Small synthetic ModelArgs-like configuration.
    n_onehot_action, n_multihot_action, n_continuous_action = 8, 4, 4
    onehot_action_sections = (4, 4)
    n_onehot_state, n_multihot_state, n_continuous_state = 8, 4, 4
    onehot_state_sections = (5, 3)
    n_action = n_onehot_action + n_multihot_action + n_continuous_action   # 16
    n_state = n_onehot_state + n_multihot_state + n_continuous_state       # 16
    n_policy_hidden = 32
    n_transition_hidden = 32
    batch = 256          # auto tile -> 2 grid steps of 128 (both v7x TCs busy)

    key = jax.random.PRNGKey(0)
    ks = jax.random.split(key, 10)

    # Deterministic parameter init (synthetic; not a checkpoint load).
    p_w1 = jax.random.normal(ks[0], (n_state, n_policy_hidden), jnp.float32) * 0.1
    p_b1 = jax.random.normal(ks[1], (1, n_policy_hidden), jnp.float32) * 0.1
    p_w2 = jax.random.normal(ks[2], (n_policy_hidden, n_action), jnp.float32) * 0.1
    p_b2 = jax.random.normal(ks[3], (1, n_action), jnp.float32) * 0.1

    t_in = n_state + n_action
    t_w1 = jax.random.normal(ks[4], (t_in, n_transition_hidden), jnp.float32) * 0.1
    t_b1 = jax.random.normal(ks[5], (1, n_transition_hidden), jnp.float32) * 0.1
    t_w2 = jax.random.normal(ks[6], (n_transition_hidden, n_state), jnp.float32) * 0.1
    t_b2 = jax.random.normal(ks[7], (1, n_state), jnp.float32) * 0.1

    state = jax.random.normal(ks[8], (batch, n_state), jnp.float32)

    # One-time weight preprocessing (hoisted out of the forward path).
    params = prepare_params(p_w1, p_b1, p_w2, p_b2, t_w1, t_b1, t_w2, t_b2,
                            n_state=n_state, matmul_dtype=jnp.float32)
    params = jax.block_until_ready(params)

    # Single fused Pallas call: policy forward + transition forward on
    # cat(state, policy_output).  Outputs are feature-major [features, B].
    action_fm, next_state_fm = policy_transition_forward(
        state, params,
        action_sections=onehot_action_sections, n_onehot_action=n_onehot_action,
        state_sections=onehot_state_sections, n_onehot_state=n_onehot_state)
    action_fm = jax.block_until_ready(action_fm)
    next_state_fm = jax.block_until_ready(next_state_fm)

    # Verify against a plain-JAX reference (transpose here is test-only; the
    # kernel keeps the feature-major convention end-to-end).
    ref_action = _reference_mlp(state, p_w1, p_b1, p_w2, p_b2,
                                onehot_action_sections, n_onehot_action)
    trans_in = jnp.concatenate([state, ref_action], axis=-1)
    ref_state = _reference_mlp(trans_in, t_w1, t_b1, t_w2, t_b2,
                               onehot_state_sections, n_onehot_state)

    assert action_fm.shape == (n_action, batch)
    assert next_state_fm.shape == (n_state, batch)
    # Exact (non-approx) softmax normalization inside the kernel -> tighter
    # tolerance than the previous version.
    assert jnp.allclose(jnp.transpose(action_fm), ref_action, atol=2e-3, rtol=2e-3)
    assert jnp.allclose(jnp.transpose(next_state_fm), ref_state, atol=2e-3, rtol=2e-3)

    print("KERNEL_OK")
</pallas_src>

<mosaic_0001>
module attributes {stable_mosaic.version = 11 : i64} {
  func.func @_fused_policy_transition_kernel(%arg0: i32, %arg1: memref<128x16xf32, #tpu.memory_space<vmem>>, %arg2: memref<32x16xf32, #tpu.memory_space<vmem>>, %arg3: memref<32x1xf32, #tpu.memory_space<vmem>>, %arg4: memref<16x32xf32, #tpu.memory_space<vmem>>, %arg5: memref<16x1xf32, #tpu.memory_space<vmem>>, %arg6: memref<32x16xf32, #tpu.memory_space<vmem>>, %arg7: memref<32x16xf32, #tpu.memory_space<vmem>>, %arg8: memref<32x1xf32, #tpu.memory_space<vmem>>, %arg9: memref<16x32xf32, #tpu.memory_space<vmem>>, %arg10: memref<16x1xf32, #tpu.memory_space<vmem>>, %arg11: memref<16x128xf32, #tpu.memory_space<vmem>>, %arg12: memref<16x128xf32, #tpu.memory_space<vmem>>) attributes {dimension_semantics = [#tpu.dimension_semantics<parallel>], iteration_bounds = array<i64: 2>, scalar_prefetch = 0 : i64, scratch_operands = 0 : i64, tpu.core_type = #tpu.core_type<tc>, window_params = [{transform_indices = @transform_0, window_bounds = array<i64: 128, 16>}, {pipeline_mode = #tpu.pipeline_mode<synchronous>, transform_indices = @transform_1, window_bounds = array<i64: 32, 16>}, {pipeline_mode = #tpu.pipeline_mode<synchronous>, transform_indices = @transform_2, window_bounds = array<i64: 32, 1>}, {pipeline_mode = #tpu.pipeline_mode<synchronous>, transform_indices = @transform_3, window_bounds = array<i64: 16, 32>}, {pipeline_mode = #tpu.pipeline_mode<synchronous>, transform_indices = @transform_4, window_bounds = array<i64: 16, 1>}, {pipeline_mode = #tpu.pipeline_mode<synchronous>, transform_indices = @transform_5, window_bounds = array<i64: 32, 16>}, {pipeline_mode = #tpu.pipeline_mode<synchronous>, transform_indices = @transform_6, window_bounds = array<i64: 32, 16>}, {pipeline_mode = #tpu.pipeline_mode<synchronous>, transform_indices = @transform_7, window_bounds = array<i64: 32, 1>}, {pipeline_mode = #tpu.pipeline_mode<synchronous>, transform_indices = @transform_8, window_bounds = array<i64: 16, 32>}, {pipeline_mode = #tpu.pipeline_mode<synchronous>, transform_indices = @transform_9, window_bounds = array<i64: 16, 1>}, {transform_indices = @transform_10, window_bounds = array<i64: 16, 128>}, {transform_indices = @transform_11, window_bounds = array<i64: 16, 128>}]} {
    %c0 = arith.constant 0 : index
    %c0_0 = arith.constant 0 : index
    %0 = vector.load %arg1[%c0, %c0_0] : memref<128x16xf32, #tpu.memory_space<vmem>>, vector<128x16xf32>
    %1 = tpu.transpose %0, [1, 0] : vector<128x16xf32> -> vector<16x128xf32>
    %c0_1 = arith.constant 0 : index
    %c0_2 = arith.constant 0 : index
    %2 = vector.load %arg2[%c0_1, %c0_2] : memref<32x16xf32, #tpu.memory_space<vmem>>, vector<32x16xf32>
    %cst = arith.constant dense<0.000000e+00> : vector<32x128xf32>
    %3 = tpu.matmul %2, %1, %cst {dimension_numbers = #tpu.dot_dimension_numbers<[1], [0], [0], [1], [0, 0, 1, 1], [], []>} : vector<32x16xf32>, vector<16x128xf32>, vector<32x128xf32> -> vector<32x128xf32>
    %c0_3 = arith.constant 0 : index
    %c0_4 = arith.constant 0 : index
    %4 = vector.load %arg3[%c0_3, %c0_4] : memref<32x1xf32, #tpu.memory_space<vmem>>, vector<32x1xf32>
    %5 = vector.broadcast %4 : vector<32x1xf32> to vector<32x128xf32>
    %6 = arith.addf %3, %5 : vector<32x128xf32>
    %cst_5 = arith.constant 0.000000e+00 : f32
    %7 = vector.broadcast %cst_5 : f32 to vector<32x128xf32>
    %8 = arith.cmpf oge, %6, %7 : vector<32x128xf32>
    %cst_6 = arith.constant 0.00999999977 : f32
    %9 = vector.broadcast %cst_6 : f32 to vector<32x128xf32>
    %10 = arith.mulf %9, %6 : vector<32x128xf32>
    %11 = arith.select %8, %6, %10 : vector<32x128xi1>, vector<32x128xf32>
    %c0_7 = arith.constant 0 : index
    %c0_8 = arith.constant 0 : index
    %12 = vector.load %arg4[%c0_7, %c0_8] : memref<16x32xf32, #tpu.memory_space<vmem>>, vector<16x32xf32>
    %cst_9 = arith.constant dense<0.000000e+00> : vector<16x128xf32>
    %13 = tpu.matmul %12, %11, %cst_9 {dimension_numbers = #tpu.dot_dimension_numbers<[1], [0], [0], [1], [0, 0, 1, 1], [], []>} : vector<16x32xf32>, vector<32x128xf32>, vector<16x128xf32> -> vector<16x128xf32>
    %c0_10 = arith.constant 0 : index
    %c0_11 = arith.constant 0 : index
    %14 = vector.load %arg5[%c0_10, %c0_11] : memref<16x1xf32, #tpu.memory_space<vmem>>, vector<16x1xf32>
    %15 = vector.broadcast %14 : vector<16x1xf32> to vector<16x128xf32>
    %16 = arith.addf %13, %15 : vector<16x128xf32>
    %17 = tpu.iota {dimensions = array<i32: 0>} : vector<16x128xi32>
    %c0_i32 = arith.constant 0 : i32
    %18 = vector.broadcast %c0_i32 : i32 to vector<16x128xi32>
    %19 = arith.cmpi sge, %17, %18 : vector<16x128xi32>
    %c4_i32 = arith.constant 4 : i32
    %20 = vector.broadcast %c4_i32 : i32 to vector<16x128xi32>
    %21 = arith.cmpi slt, %17, %20 : vector<16x128xi32>
    %22 = arith.andi %19, %21 : vector<16x128xi1>
    %cst_12 = arith.constant 0xFF800000 : f32
    %23 = vector.broadcast %cst_12 : f32 to vector<16x128xf32>
    %24 = arith.select %22, %16, %23 : vector<16x128xi1>, vector<16x128xf32>
    %cst_13 = arith.constant dense<0xFF800000> : vector<128xf32>
    %25 = vector.multi_reduction <maximumf>, %24, %cst_13 [0] : vector<16x128xf32> to vector<128xf32>
    %26 = vector.shape_cast %25 : vector<128xf32> to vector<1x128xf32>
    %27 = vector.shape_cast %26 : vector<1x128xf32> to vector<1x128xf32>
    %28 = vector.broadcast %27 : vector<1x128xf32> to vector<16x128xf32>
    %29 = arith.select %22, %28, %16 : vector<16x128xi1>, vector<16x128xf32>
    %c4_i32_14 = arith.constant 4 : i32
    %30 = vector.broadcast %c4_i32_14 : i32 to vector<16x128xi32>
    %31 = arith.cmpi sge, %17, %30 : vector<16x128xi32>
    %c8_i32 = arith.constant 8 : i32
    %32 = vector.broadcast %c8_i32 : i32 to vector<16x128xi32>
    %33 = arith.cmpi slt, %17, %32 : vector<16x128xi32>
    %34 = arith.andi %31, %33 : vector<16x128xi1>
    %cst_15 = arith.constant 0xFF800000 : f32
    %35 = vector.broadcast %cst_15 : f32 to vector<16x128xf32>
    %36 = arith.select %34, %16, %35 : vector<16x128xi1>, vector<16x128xf32>
    %cst_16 = arith.constant dense<0xFF800000> : vector<128xf32>
    %37 = vector.multi_reduction <maximumf>, %36, %cst_16 [0] : vector<16x128xf32> to vector<128xf32>
    %38 = vector.shape_cast %37 : vector<128xf32> to vector<1x128xf32>
    %39 = vector.shape_cast %38 : vector<1x128xf32> to vector<1x128xf32>
    %40 = vector.broadcast %39 : vector<1x128xf32> to vector<16x128xf32>
    %41 = arith.select %34, %40, %29 : vector<16x128xi1>, vector<16x128xf32>
    %42 = arith.subf %16, %41 : vector<16x128xf32>
    %43 = math.exp %42 : vector<16x128xf32>
    %cst_17 = arith.constant 1.000000e+00 : f32
    %44 = vector.broadcast %cst_17 : f32 to vector<16x128xf32>
    %cst_18 = arith.constant 0.000000e+00 : f32
    %45 = vector.broadcast %cst_18 : f32 to vector<16x128xf32>
    %46 = arith.select %22, %43, %45 : vector<16x128xi1>, vector<16x128xf32>
    %cst_19 = arith.constant dense<0.000000e+00> : vector<128xf32>
    %47 = vector.multi_reduction <add>, %46, %cst_19 [0] : vector<16x128xf32> to vector<128xf32>
    %48 = vector.shape_cast %47 : vector<128xf32> to vector<1x128xf32>
    %cst_20 = arith.constant 1.000000e+00 : f32
    %49 = vector.broadcast %cst_20 : f32 to vector<1x128xf32>
    %50 = arith.divf %49, %48 : vector<1x128xf32>
    %51 = vector.shape_cast %50 : vector<1x128xf32> to vector<1x128xf32>
    %52 = vector.broadcast %51 : vector<1x128xf32> to vector<16x128xf32>
    %53 = arith.select %22, %52, %44 : vector<16x128xi1>, vector<16x128xf32>
    %cst_21 = arith.constant 0.000000e+00 : f32
    %54 = vector.broadcast %cst_21 : f32 to vector<16x128xf32>
    %55 = arith.select %34, %43, %54 : vector<16x128xi1>, vector<16x128xf32>
    %cst_22 = arith.constant dense<0.000000e+00> : vector<128xf32>
    %56 = vector.multi_reduction <add>, %55, %cst_22 [0] : vector<16x128xf32> to vector<128xf32>
    %57 = vector.shape_cast %56 : vector<128xf32> to vector<1x128xf32>
    %cst_23 = arith.constant 1.000000e+00 : f32
    %58 = vector.broadcast %cst_23 : f32 to vector<1x128xf32>
    %59 = arith.divf %58, %57 : vector<1x128xf32>
    %60 = vector.shape_cast %59 : vector<1x128xf32> to vector<1x128xf32>
    %61 = vector.broadcast %60 : vector<1x128xf32> to vector<16x128xf32>
    %62 = arith.select %34, %61, %53 : vector<16x128xi1>, vector<16x128xf32>
    %c8_i32_24 = arith.constant 8 : i32
    %63 = vector.broadcast %c8_i32_24 : i32 to vector<16x128xi32>
    %64 = arith.cmpi slt, %17, %63 : vector<16x128xi32>
    %65 = arith.mulf %43, %62 : vector<16x128xf32>
    %66 = math.tanh %16 : vector<16x128xf32>
    %67 = arith.select %64, %65, %66 : vector<16x128xi1>, vector<16x128xf32>
    %c0_25 = arith.constant 0 : index
    %c0_26 = arith.constant 0 : index
    %68 = vector.load %arg11[%c0_25, %c0_26] : memref<16x128xf32, #tpu.memory_space<vmem>>, vector<16x128xf32>
    tpu.vector_store %arg11[%c0_25, %c0_26], %67 {strides = array<i32>} : memref<16x128xf32, #tpu.memory_space<vmem>>, vector<16x128xf32>,
    %c0_27 = arith.constant 0 : index
    %c0_28 = arith.constant 0 : index
    %69 = vector.load %arg6[%c0_27, %c0_28] : memref<32x16xf32, #tpu.memory_space<vmem>>, vector<32x16xf32>
    %cst_29 = arith.constant dense<0.000000e+00> : vector<32x128xf32>
    %70 = tpu.matmul %69, %1, %cst_29 {dimension_numbers = #tpu.dot_dimension_numbers<[1], [0], [0], [1], [0, 0, 1, 1], [], []>} : vector<32x16xf32>, vector<16x128xf32>, vector<32x128xf32> -> vector<32x128xf32>
    %c0_30 = arith.constant 0 : index
    %c0_31 = arith.constant 0 : index
    %71 = vector.load %arg7[%c0_30, %c0_31] : memref<32x16xf32, #tpu.memory_space<vmem>>, vector<32x16xf32>
    %cst_32 = arith.constant dense<0.000000e+00> : vector<32x128xf32>
    %72 = tpu.matmul %71, %67, %cst_32 {dimension_numbers = #tpu.dot_dimension_numbers<[1], [0], [0], [1], [0, 0, 1, 1], [], []>} : vector<32x16xf32>, vector<16x128xf32>, vector<32x128xf32> -> vector<32x128xf32>
    %73 = arith.addf %70, %72 : vector<32x128xf32>
    %c0_33 = arith.constant 0 : index
    %c0_34 = arith.constant 0 : index
    %74 = vector.load %arg8[%c0_33, %c0_34] : memref<32x1xf32, #tpu.memory_space<vmem>>, vector<32x1xf32>
    %75 = vector.broadcast %74 : vector<32x1xf32> to vector<32x128xf32>
    %76 = arith.addf %73, %75 : vector<32x128xf32>
    %cst_35 = arith.constant 0.000000e+00 : f32
    %77 = vector.broadcast %cst_35 : f32 to vector<32x128xf32>
    %78 = arith.cmpf oge, %76, %77 : vector<32x128xf32>
    %cst_36 = arith.constant 0.00999999977 : f32
    %79 = vector.broadcast %cst_36 : f32 to vector<32x128xf32>
    %80 = arith.mulf %79, %76 : vector<32x128xf32>
    %81 = arith.select %78, %76, %80 : vector<32x128xi1>, vector<32x128xf32>
    %c0_37 = arith.constant 0 : index
    %c0_38 = arith.constant 0 : index
    %82 = vector.load %arg9[%c0_37, %c0_38] : memref<16x32xf32, #tpu.memory_space<vmem>>, vector<16x32xf32>
    %cst_39 = arith.constant dense<0.000000e+00> : vector<16x128xf32>
    %83 = tpu.matmul %82, %81, %cst_39 {dimension_numbers = #tpu.dot_dimension_numbers<[1], [0], [0], [1], [0, 0, 1, 1], [], []>} : vector<16x32xf32>, vector<32x128xf32>, vector<16x128xf32> -> vector<16x128xf32>
    %c0_40 = arith.constant 0 : index
    %c0_41 = arith.constant 0 : index
    %84 = vector.load %arg10[%c0_40, %c0_41] : memref<16x1xf32, #tpu.memory_space<vmem>>, vector<16x1xf32>
    %85 = vector.broadcast %84 : vector<16x1xf32> to vector<16x128xf32>
    %86 = arith.addf %83, %85 : vector<16x128xf32>
    %87 = tpu.iota {dimensions = array<i32: 0>} : vector<16x128xi32>
    %c0_i32_42 = arith.constant 0 : i32
    %88 = vector.broadcast %c0_i32_42 : i32 to vector<16x128xi32>
    %89 = arith.cmpi sge, %87, %88 : vector<16x128xi32>
    %c5_i32 = arith.constant 5 : i32
    %90 = vector.broadcast %c5_i32 : i32 to vector<16x128xi32>
    %91 = arith.cmpi slt, %87, %90 : vector<16x128xi32>
    %92 = arith.andi %89, %91 : vector<16x128xi1>
    %cst_43 = arith.constant 0xFF800000 : f32
    %93 = vector.broadcast %cst_43 : f32 to vector<16x128xf32>
    %94 = arith.select %92, %86, %93 : vector<16x128xi1>, vector<16x128xf32>
    %cst_44 = arith.constant dense<0xFF800000> : vector<128xf32>
    %95 = vector.multi_reduction <maximumf>, %94, %cst_44 [0] : vector<16x128xf32> to vector<128xf32>
    %96 = vector.shape_cast %95 : vector<128xf32> to vector<1x128xf32>
    %97 = vector.shape_cast %96 : vector<1x128xf32> to vector<1x128xf32>
    %98 = vector.broadcast %97 : vector<1x128xf32> to vector<16x128xf32>
    %99 = arith.select %92, %98, %86 : vector<16x128xi1>, vector<16x128xf32>
    %c5_i32_45 = arith.constant 5 : i32
    %100 = vector.broadcast %c5_i32_45 : i32 to vector<16x128xi32>
    %101 = arith.cmpi sge, %87, %100 : vector<16x128xi32>
    %c8_i32_46 = arith.constant 8 : i32
    %102 = vector.broadcast %c8_i32_46 : i32 to vector<16x128xi32>
    %103 = arith.cmpi slt, %87, %102 : vector<16x128xi32>
    %104 = arith.andi %101, %103 : vector<16x128xi1>
    %cst_47 = arith.constant 0xFF800000 : f32
    %105 = vector.broadcast %cst_47 : f32 to vector<16x128xf32>
    %106 = arith.select %104, %86, %105 : vector<16x128xi1>, vector<16x128xf32>
    %cst_48 = arith.constant dense<0xFF800000> : vector<128xf32>
    %107 = vector.multi_reduction <maximumf>, %106, %cst_48 [0] : vector<16x128xf32> to vector<128xf32>
    %108 = vector.shape_cast %107 : vector<128xf32> to vector<1x128xf32>
    %109 = vector.shape_cast %108 : vector<1x128xf32> to vector<1x128xf32>
    %110 = vector.broadcast %109 : vector<1x128xf32> to vector<16x128xf32>
    %111 = arith.select %104, %110, %99 : vector<16x128xi1>, vector<16x128xf32>
    %112 = arith.subf %86, %111 : vector<16x128xf32>
    %113 = math.exp %112 : vector<16x128xf32>
    %cst_49 = arith.constant 1.000000e+00 : f32
    %114 = vector.broadcast %cst_49 : f32 to vector<16x128xf32>
    %cst_50 = arith.constant 0.000000e+00 : f32
    %115 = vector.broadcast %cst_50 : f32 to vector<16x128xf32>
    %116 = arith.select %92, %113, %115 : vector<16x128xi1>, vector<16x128xf32>
    %cst_51 = arith.constant dense<0.000000e+00> : vector<128xf32>
    %117 = vector.multi_reduction <add>, %116, %cst_51 [0] : vector<16x128xf32> to vector<128xf32>
    %118 = vector.shape_cast %117 : vector<128xf32> to vector<1x128xf32>
    %cst_52 = arith.constant 1.000000e+00 : f32
    %119 = vector.broadcast %cst_52 : f32 to vector<1x128xf32>
    %120 = arith.divf %119, %118 : vector<1x128xf32>
    %121 = vector.shape_cast %120 : vector<1x128xf32> to vector<1x128xf32>
    %122 = vector.broadcast %121 : vector<1x128xf32> to vector<16x128xf32>
    %123 = arith.select %92, %122, %114 : vector<16x128xi1>, vector<16x128xf32>
    %cst_53 = arith.constant 0.000000e+00 : f32
    %124 = vector.broadcast %cst_53 : f32 to vector<16x128xf32>
    %125 = arith.select %104, %113, %124 : vector<16x128xi1>, vector<16x128xf32>
    %cst_54 = arith.constant dense<0.000000e+00> : vector<128xf32>
    %126 = vector.multi_reduction <add>, %125, %cst_54 [0] : vector<16x128xf32> to vector<128xf32>
    %127 = vector.shape_cast %126 : vector<128xf32> to vector<1x128xf32>
    %cst_55 = arith.constant 1.000000e+00 : f32
    %128 = vector.broadcast %cst_55 : f32 to vector<1x128xf32>
    %129 = arith.divf %128, %127 : vector<1x128xf32>
    %130 = vector.shape_cast %129 : vector<1x128xf32> to vector<1x128xf32>
    %131 = vector.broadcast %130 : vector<1x128xf32> to vector<16x128xf32>
    %132 = arith.select %104, %131, %123 : vector<16x128xi1>, vector<16x128xf32>
    %c8_i32_56 = arith.constant 8 : i32
    %133 = vector.broadcast %c8_i32_56 : i32 to vector<16x128xi32>
    %134 = arith.cmpi slt, %87, %133 : vector<16x128xi32>
    %135 = arith.mulf %113, %132 : vector<16x128xf32>
    %136 = math.tanh %86 : vector<16x128xf32>
    %137 = arith.select %134, %135, %136 : vector<16x128xi1>, vector<16x128xf32>
    %c0_57 = arith.constant 0 : index
    %c0_58 = arith.constant 0 : index
    %138 = vector.load %arg12[%c0_57, %c0_58] : memref<16x128xf32, #tpu.memory_space<vmem>>, vector<16x128xf32>
    tpu.vector_store %arg12[%c0_57, %c0_58], %137 {strides = array<i32>} : memref<16x128xf32, #tpu.memory_space<vmem>>, vector<16x128xf32>,
    return
  }
  func.func @transform_0(%arg0: i32) -> (i32, i32) {
    %c0_i32 = arith.constant 0 : i32
    %c0_i32_0 = arith.constant 0 : i32
    return %arg0, %c0_i32 : i32, i32
  }
  func.func @transform_1(%arg0: i32) -> (i32, i32) {
    %c0_i32 = arith.constant 0 : i32
    %c0_i32_0 = arith.constant 0 : i32
    %c0_i32_1 = arith.constant 0 : i32
    return %c0_i32, %c0_i32_0 : i32, i32
  }
  func.func @transform_2(%arg0: i32) -> (i32, i32) {
    %c0_i32 = arith.constant 0 : i32
    %c0_i32_0 = arith.constant 0 : i32
    %c0_i32_1 = arith.constant 0 : i32
    return %c0_i32, %c0_i32_0 : i32, i32
  }
  func.func @transform_3(%arg0: i32) -> (i32, i32) {
    %c0_i32 = arith.constant 0 : i32
    %c0_i32_0 = arith.constant 0 : i32
    %c0_i32_1 = arith.constant 0 : i32
    return %c0_i32, %c0_i32_0 : i32, i32
  }
  func.func @transform_4(%arg0: i32) -> (i32, i32) {
    %c0_i32 = arith.constant 0 : i32
    %c0_i32_0 = arith.constant 0 : i32
    %c0_i32_1 = arith.constant 0 : i32
    return %c0_i32, %c0_i32_0 : i32, i32
  }
  func.func @transform_5(%arg0: i32) -> (i32, i32) {
    %c0_i32 = arith.constant 0 : i32
    %c0_i32_0 = arith.constant 0 : i32
    %c0_i32_1 = arith.constant 0 : i32
    return %c0_i32, %c0_i32_0 : i32, i32
  }
  func.func @transform_6(%arg0: i32) -> (i32, i32) {
    %c0_i32 = arith.constant 0 : i32
    %c0_i32_0 = arith.constant 0 : i32
    %c0_i32_1 = arith.constant 0 : i32
    return %c0_i32, %c0_i32_0 : i32, i32
  }
  func.func @transform_7(%arg0: i32) -> (i32, i32) {
    %c0_i32 = arith.constant 0 : i32
    %c0_i32_0 = arith.constant 0 : i32
    %c0_i32_1 = arith.constant 0 : i32
    return %c0_i32, %c0_i32_0 : i32, i32
  }
  func.func @transform_8(%arg0: i32) -> (i32, i32) {
    %c0_i32 = arith.constant 0 : i32
    %c0_i32_0 = arith.constant 0 : i32
    %c0_i32_1 = arith.constant 0 : i32
    return %c0_i32, %c0_i32_0 : i32, i32
  }
  func.func @transform_9(%arg0: i32) -> (i32, i32) {
    %c0_i32 = arith.constant 0 : i32
    %c0_i32_0 = arith.constant 0 : i32
    %c0_i32_1 = arith.constant 0 : i32
    return %c0_i32, %c0_i32_0 : i32, i32
  }
  func.func @transform_10(%arg0: i32) -> (i32, i32) {
    %c0_i32 = arith.constant 0 : i32
    %c0_i32_0 = arith.constant 0 : i32
    return %c0_i32, %arg0 : i32, i32
  }
  func.func @transform_11(%arg0: i32) -> (i32, i32) {
    %c0_i32 = arith.constant 0 : i32
    %c0_i32_0 = arith.constant 0 : i32
    return %c0_i32, %arg0 : i32, i32
  }
}

</mosaic_0001>

<llo_original>
// kernel: tpu_custom_call.1
$region0: #{tpu_custom_call.1}
  #allocation0 [shape = 'u32[]', space=smem, size = 0x4, offset = 0x4, fixed_abs, tag = 'smem constant byte address 0x4 - core index']
  #allocation1 [shape = 'u32[144,128]{1,0:T(1,128)}', space=vmem, size = 0x12000, scoped, tag = 'internal scratch']
  %s0 = inlined_call_operand.vmem [shape: f32[256,16], index: 0, kind: input, shape index: {}]
  %s1 = inlined_call_operand.vmem [shape: f32[32,16], index: 1, kind: input, shape index: {}]
  %s2 = inlined_call_operand.vmem [shape: f32[32,1], index: 2, kind: input, shape index: {}]
  %s3 = inlined_call_operand.vmem [shape: f32[16,32], index: 3, kind: input, shape index: {}]
  %s4 = inlined_call_operand.vmem [shape: f32[16,1], index: 4, kind: input, shape index: {}]
  %s5 = inlined_call_operand.vmem [shape: f32[32,16], index: 5, kind: input, shape index: {}]
  %s6 = inlined_call_operand.vmem [shape: f32[32,16], index: 6, kind: input, shape index: {}]
  %s7 = inlined_call_operand.vmem [shape: f32[32,1], index: 7, kind: input, shape index: {}]
  %s8 = inlined_call_operand.vmem [shape: f32[16,32], index: 8, kind: input, shape index: {}]
  %s9 = inlined_call_operand.vmem [shape: f32[16,1], index: 9, kind: input, shape index: {}]
  %s10 = inlined_call_operand.hbm [shape: f32[16,256], index: 10, kind: output, shape index: {0}]
  %s11 = inlined_call_operand.hbm [shape: f32[16,256], index: 11, kind: output, shape index: {1}]
  %12 = xla_tuple %s10, %s11
  %s13 = sld [smem:[#allocation0]]
  $region81: #{tpu_custom_call.1} parent=0
    _
  %s15 = ssub.s32 1, %s13
  %s16 = scalar_select 0, %s15, %s13
  $region1: #{tpu_custom_call.1} parent=0
    #allocation2 [shape = 'u8[16384]{0}', space=vmem, size = 0x4000, scoped, tag = 'output window, operand 0']
    #allocation3 [shape = 's32[2]{0}', space=sflag, size = 0x8, scoped, tag = 'scoped memory for tpu_custom_call.1']
    #allocation4 [shape = 'u8[16384]{0}', space=vmem, size = 0x4000, scoped, tag = 'output window, operand 1']
    #allocation5 [shape = 's32[2]{0}', space=sflag, size = 0x8, scoped, tag = 'scoped memory for tpu_custom_call.1']
    %17 = vsyncpa [#allocation3], 0
    %s18 = scalar_lea.sflag [#allocation3], 1
    %19 = vsyncpa %s18, 0
    %20 = vsyncpa [#allocation5], 0
    %s21 = scalar_lea.sflag [#allocation5], 1
    %22 = vsyncpa %s21, 0
    loop: start=0, step=1, limit=4
    $region2: #{tpu_custom_call.1} parent=1 // loop_pre_header
      _
    $region3: #{tpu_custom_call.1} parent=1 // loop_header
      %s24 = sphi 0, %s28
      %p25 = scmp.ge.s32.totalorder %s24, 4
      %s34 = sphi 0, %s36
      %s37 = sphi 0, %s34
      %s38 = sphi 0, %s37
      %s54 = sphi 0, %s38
      %s58 = sphi 0, %s58
      %s60 = sphi 0, %s58
      %s61 = sphi 0, %s60
      %s75 = sphi 0, %s61
      %s79 = sphi 0, %s79
      %s81 = sphi 0, %s79
      %s82 = sphi 0, %s81
      %s96 = sphi 0, %s82
      %s100 = sphi 0, %s100
      %s102 = sphi 0, %s100
      %s103 = sphi 0, %s102
      %s117 = sphi 0, %s103
      %s121 = sphi 0, %s121
      %s123 = sphi 0, %s121
      %s124 = sphi 0, %s123
      %s138 = sphi 0, %s124
      %s142 = sphi 0, %s142
      %s144 = sphi 0, %s142
      %s145 = sphi 0, %s144
      %s159 = sphi 0, %s145
      %s163 = sphi 0, %s163
      %s165 = sphi 0, %s163
      %s166 = sphi 0, %s165
      %s180 = sphi 0, %s166
      %s184 = sphi 0, %s184
      %s186 = sphi 0, %s184
      %s187 = sphi 0, %s186
      %s201 = sphi 0, %s187
      %s205 = sphi 0, %s205
      %s207 = sphi 0, %s205
      %s208 = sphi 0, %s207
      %s222 = sphi 0, %s208
      %s226 = sphi 0, %s226
      %s228 = sphi 0, %s226
      %s229 = sphi 0, %s228
      %s243 = sphi 0, %s229
      %s249 = sphi 0, %s251
      %s252 = sphi 0, %s249
      %s253 = sphi 0, %s252
      %s269 = sphi 0, %s253
      %s275 = sphi 0, %s277
      %s278 = sphi 0, %s275
      %s279 = sphi 0, %s278
      %s295 = sphi 0, %s279
    $region4: #{tpu_custom_call.1} parent=1 // loop_header_branch
      %27 = sbr.rel (%p25) target = $region8
    $region5: #{tpu_custom_call.1} parent=1 // loop_body
      %s29 = ssub.s32 %s24, 1
      %s30 = ssub.s32 %s24, 2
      %s31 = sadd.s32 %s24, 1
      %s32 = ssub.s32 %s24, %s31
      %p33 = scmp.eq.s32.totalorder %s32, 0
      %s35 = sadd.s32 %s34, 1
      %s36 = scalar_select %p33, %s34, %s35
      %p39 = pneg %p33
      %p40 = scmp.eq.s32.totalorder %s24, 1
      %p41 = por %p39, %p40
      %p42 = scmp.ne.s32.totalorder %s34, %s37
      %p43 = scmp.eq.s32.totalorder %s24, 0
      %p44 = por %p42, %p43
      %p45 = scmp.ne.s32.totalorder %s34, %s37
      %p46 = scmp.eq.s32.totalorder %s29, 1
      %p47 = por %p45, %p46
      %p48 = scmp.ne.s32.totalorder %s37, %s38
      %p49 = scmp.eq.s32.totalorder %s29, 0
      %p50 = por %p48, %p49
      %p51 = scmp.ne.s32.totalorder %s37, %s38
      %p52 = scmp.eq.s32.totalorder %s30, 1
      %p53 = por %p51, %p52
      %p55 = scmp.ne.s32.totalorder %s38, %s54
      %p56 = scmp.eq.s32.totalorder %s30, 0
      %p57 = por %p55, %p56
      %s59 = sadd.s32 %s58, 1
      %p62 = scmp.eq.s32.totalorder %s24, 1
      %p63 = scmp.ne.s32.totalorder %s58, %s60
      %p64 = scmp.eq.s32.totalorder %s24, 0
      %p65 = por %p63, %p64
      %p66 = scmp.ne.s32.totalorder %s58, %s60
      %p67 = scmp.eq.s32.totalorder %s29, 1
      %p68 = por %p66, %p67
      %p69 = scmp.ne.s32.totalorder %s60, %s61
      %p70 = scmp.eq.s32.totalorder %s29, 0
      %p71 = por %p69, %p70
      %p72 = scmp.ne.s32.totalorder %s60, %s61
      %p73 = scmp.eq.s32.totalorder %s30, 1
      %p74 = por %p72, %p73
      %p76 = scmp.ne.s32.totalorder %s61, %s75
      %p77 = scmp.eq.s32.totalorder %s30, 0
      %p78 = por %p76, %p77
      %s80 = sadd.s32 %s79, 1
      %p83 = scmp.eq.s32.totalorder %s24, 1
      %p84 = scmp.ne.s32.totalorder %s79, %s81
      %p85 = scmp.eq.s32.totalorder %s24, 0
      %p86 = por %p84, %p85
      %p87 = scmp.ne.s32.totalorder %s79, %s81
      %p88 = scmp.eq.s32.totalorder %s29, 1
      %p89 = por %p87, %p88
      %p90 = scmp.ne.s32.totalorder %s81, %s82
      %p91 = scmp.eq.s32.totalorder %s29, 0
      %p92 = por %p90, %p91
      %p93 = scmp.ne.s32.totalorder %s81, %s82
      %p94 = scmp.eq.s32.totalorder %s30, 1
      %p95 = por %p93, %p94
      %p97 = scmp.ne.s32.totalorder %s82, %s96
      %p98 = scmp.eq.s32.totalorder %s30, 0
      %p99 = por %p97, %p98
      %s101 = sadd.s32 %s100, 1
      %p104 = scmp.eq.s32.totalorder %s24, 1
      %p105 = scmp.ne.s32.totalorder %s100, %s102
      %p106 = scmp.eq.s32.totalorder %s24, 0
      %p107 = por %p105, %p106
      %p108 = scmp.ne.s32.totalorder %s100, %s102
      %p109 = scmp.eq.s32.totalorder %s29, 1
      %p110 = por %p108, %p109
      %p111 = scmp.ne.s32.totalorder %s102, %s103
      %p112 = scmp.eq.s32.totalorder %s29, 0
      %p113 = por %p111, %p112
      %p114 = scmp.ne.s32.totalorder %s102, %s103
      %p115 = scmp.eq.s32.totalorder %s30, 1
      %p116 = por %p114, %p115
      %p118 = scmp.ne.s32.totalorder %s103, %s117
      %p119 = scmp.eq.s32.totalorder %s30, 0
      %p120 = por %p118, %p119
      %s122 = sadd.s32 %s121, 1
      %p125 = scmp.eq.s32.totalorder %s24, 1
      %p126 = scmp.ne.s32.totalorder %s121, %s123
      %p127 = scmp.eq.s32.totalorder %s24, 0
      %p128 = por %p126, %p127
      %p129 = scmp.ne.s32.totalorder %s121, %s123
      %p130 = scmp.eq.s32.totalorder %s29, 1
      %p131 = por %p129, %p130
      %p132 = scmp.ne.s32.totalorder %s123, %s124
      %p133 = scmp.eq.s32.totalorder %s29, 0
      %p134 = por %p132, %p133
      %p135 = scmp.ne.s32.totalorder %s123, %s124
      %p136 = scmp.eq.s32.totalorder %s30, 1
      %p137 = por %p135, %p136
      %p139 = scmp.ne.s32.totalorder %s124, %s138
      %p140 = scmp.eq.s32.totalorder %s30, 0
      %p141 = por %p139, %p140
      %s143 = sadd.s32 %s142, 1
      %p146 = scmp.eq.s32.totalorder %s24, 1
      %p147 = scmp.ne.s32.totalorder %s142, %s144
      %p148 = scmp.eq.s32.totalorder %s24, 0
      %p149 = por %p147, %p148
      %p150 = scmp.ne.s32.totalorder %s142, %s144
      %p151 = scmp.eq.s32.totalorder %s29, 1
      %p152 = por %p150, %p151
      %p153 = scmp.ne.s32.totalorder %s144, %s145
      %p154 = scmp.eq.s32.totalorder %s29, 0
      %p155 = por %p153, %p154
      %p156 = scmp.ne.s32.totalorder %s144, %s145
      %p157 = scmp.eq.s32.totalorder %s30, 1
      %p158 = por %p156, %p157
      %p160 = scmp.ne.s32.totalorder %s145, %s159
      %p161 = scmp.eq.s32.totalorder %s30, 0
      %p162 = por %p160, %p161
      %s164 = sadd.s32 %s163, 1
      %p167 = scmp.eq.s32.totalorder %s24, 1
      %p168 = scmp.ne.s32.totalorder %s163, %s165
      %p169 = scmp.eq.s32.totalorder %s24, 0
      %p170 = por %p168, %p169
      %p171 = scmp.ne.s32.totalorder %s163, %s165
      %p172 = scmp.eq.s32.totalorder %s29, 1
      %p173 = por %p171, %p172
      %p174 = scmp.ne.s32.totalorder %s165, %s166
      %p175 = scmp.eq.s32.totalorder %s29, 0
      %p176 = por %p174, %p175
      %p177 = scmp.ne.s32.totalorder %s165, %s166
      %p178 = scmp.eq.s32.totalorder %s30, 1
      %p179 = por %p177, %p178
      %p181 = scmp.ne.s32.totalorder %s166, %s180
      %p182 = scmp.eq.s32.totalorder %s30, 0
      %p183 = por %p181, %p182
      %s185 = sadd.s32 %s184, 1
      %p188 = scmp.eq.s32.totalorder %s24, 1
      %p189 = scmp.ne.s32.totalorder %s184, %s186
      %p190 = scmp.eq.s32.totalorder %s24, 0
      %p191 = por %p189, %p190
      %p192 = scmp.ne.s32.totalorder %s184, %s186
      %p193 = scmp.eq.s32.totalorder %s29, 1
      %p194 = por %p192, %p193
      %p195 = scmp.ne.s32.totalorder %s186, %s187
      %p196 = scmp.eq.s32.totalorder %s29, 0
      %p197 = por %p195, %p196
      %p198 = scmp.ne.s32.totalorder %s186, %s187
      %p199 = scmp.eq.s32.totalorder %s30, 1
      %p200 = por %p198, %p199
      %p202 = scmp.ne.s32.totalorder %s187, %s201
      %p203 = scmp.eq.s32.totalorder %s30, 0
      %p204 = por %p202, %p203
      %s206 = sadd.s32 %s205, 1
      %p209 = scmp.eq.s32.totalorder %s24, 1
      %p210 = scmp.ne.s32.totalorder %s205, %s207
      %p211 = scmp.eq.s32.totalorder %s24, 0
      %p212 = por %p210, %p211
      %p213 = scmp.ne.s32.totalorder %s205, %s207
      %p214 = scmp.eq.s32.totalorder %s29, 1
      %p215 = por %p213, %p214
      %p216 = scmp.ne.s32.totalorder %s207, %s208
      %p217 = scmp.eq.s32.totalorder %s29, 0
      %p218 = por %p216, %p217
      %p219 = scmp.ne.s32.totalorder %s207, %s208
      %p220 = scmp.eq.s32.totalorder %s30, 1
      %p221 = por %p219, %p220
      %p223 = scmp.ne.s32.totalorder %s208, %s222
      %p224 = scmp.eq.s32.totalorder %s30, 0
      %p225 = por %p223, %p224
      %s227 = sadd.s32 %s226, 1
      %p230 = scmp.eq.s32.totalorder %s24, 1
      %p231 = scmp.ne.s32.totalorder %s226, %s228
      %p232 = scmp.eq.s32.totalorder %s24, 0
      %p233 = por %p231, %p232
      %p234 = scmp.ne.s32.totalorder %s226, %s228
      %p235 = scmp.eq.s32.totalorder %s29, 1
      %p236 = por %p234, %p235
      %p237 = scmp.ne.s32.totalorder %s228, %s229
      %p238 = scmp.eq.s32.totalorder %s29, 0
      %p239 = por %p237, %p238
      %p240 = scmp.ne.s32.totalorder %s228, %s229
      %p241 = scmp.eq.s32.totalorder %s30, 1
      %p242 = por %p240, %p241
      %p244 = scmp.ne.s32.totalorder %s229, %s243
      %p245 = scmp.eq.s32.totalorder %s30, 0
      %p246 = por %p244, %p245
      %s247 = ssub.s32 %s24, %s31
      %p248 = scmp.eq.s32.totalorder %s247, 0
      %s250 = sadd.s32 %s249, 1
      %s251 = scalar_select %p248, %s249, %s250
      %p254 = pneg %p248
      %p255 = scmp.eq.s32.totalorder %s24, 1
      %p256 = por %p254, %p255
      %p257 = scmp.ne.s32.totalorder %s249, %s252
      %p258 = scmp.eq.s32.totalorder %s24, 0
      %p259 = por %p257, %p258
      %p260 = scmp.ne.s32.totalorder %s249, %s252
      %p261 = scmp.eq.s32.totalorder %s29, 1
      %p262 = por %p260, %p261
      %p263 = scmp.ne.s32.totalorder %s252, %s253
      %p264 = scmp.eq.s32.totalorder %s29, 0
      %p265 = por %p263, %p264
      %p266 = scmp.ne.s32.totalorder %s252, %s253
      %p267 = scmp.eq.s32.totalorder %s30, 1
      %p268 = por %p266, %p267
      %p270 = scmp.ne.s32.totalorder %s253, %s269
      %p271 = scmp.eq.s32.totalorder %s30, 0
      %p272 = por %p270, %p271
      %s273 = ssub.s32 %s24, %s31
      %p274 = scmp.eq.s32.totalorder %s273, 0
      %s276 = sadd.s32 %s275, 1
      %s277 = scalar_select %p274, %s275, %s276
      %p280 = pneg %p274
      %p281 = scmp.eq.s32.totalorder %s24, 1
      %p282 = por %p280, %p281
      %p283 = scmp.ne.s32.totalorder %s275, %s278
      %p284 = scmp.eq.s32.totalorder %s24, 0
      %p285 = por %p283, %p284
      %p286 = scmp.ne.s32.totalorder %s275, %s278
      %p287 = scmp.eq.s32.totalorder %s29, 1
      %p288 = por %p286, %p287
      %p289 = scmp.ne.s32.totalorder %s278, %s279
      %p290 = scmp.eq.s32.totalorder %s29, 0
      %p291 = por %p289, %p290
      %p292 = scmp.ne.s32.totalorder %s278, %s279
      %p293 = scmp.eq.s32.totalorder %s30, 1
      %p294 = por %p292, %p293
      %p296 = scmp.ne.s32.totalorder %s279, %s295
      %p297 = scmp.eq.s32.totalorder %s30, 0
      %p298 = por %p296, %p297
      %p299 = scmp.le.s32.totalorder 1, %s24
      %p300 = scmp.lt.s32.totalorder %s24, 3
      %p301 = pnand %p299, %p300
      %p302 = pneg %p301
      // Predicated region
      $region9: #{tpu_custom_call.1} parent=5 // pred_check
        _
      $region10: #{tpu_custom_call.1} parent=5 // pred_check_branch
        %304 = sbr.rel (%p301) target = $region12
      $region11: #{tpu_custom_call.1} parent=5 // pred_region
        %s305 = ssub.s32 %s24, 1
        // Predicated region
        $region13: #{tpu_custom_call.1} parent=11 // pred_check
          %p306 = pneg %p71
        $region14: #{tpu_custom_call.1} parent=11 // pred_check_branch
          %308 = sbr.rel (%p306) target = $region16
        $region15: #{tpu_custom_call.1} parent=11 // pred_region
          _
        $region16: #{tpu_custom_call.1} parent=11 // pred_fallthru
          _
        // Predicated region
        $region17: #{tpu_custom_call.1} parent=11 // pred_check
          %p309 = pneg %p92
        $region18: #{tpu_custom_call.1} parent=11 // pred_check_branch
          %311 = sbr.rel (%p309) target = $region20
        $region19: #{tpu_custom_call.1} parent=11 // pred_region
          _
        $region20: #{tpu_custom_call.1} parent=11 // pred_fallthru
          _
        // Predicated region
        $region21: #{tpu_custom_call.1} parent=11 // pred_check
          %p312 = pneg %p113
        $region22: #{tpu_custom_call.1} parent=11 // pred_check_branch
          %314 = sbr.rel (%p312) target = $region24
        $region23: #{tpu_custom_call.1} parent=11 // pred_region
          _
        $region24: #{tpu_custom_call.1} parent=11 // pred_fallthru
          _
        // Predicated region
        $region25: #{tpu_custom_call.1} parent=11 // pred_check
          %p315 = pneg %p134
        $region26: #{tpu_custom_call.1} parent=11 // pred_check_branch
          %317 = sbr.rel (%p315) target = $region28
        $region27: #{tpu_custom_call.1} parent=11 // pred_region
          _
        $region28: #{tpu_custom_call.1} parent=11 // pred_fallthru
          _
        // Predicated region
        $region29: #{tpu_custom_call.1} parent=11 // pred_check
          %p318 = pneg %p155
        $region30: #{tpu_custom_call.1} parent=11 // pred_check_branch
          %320 = sbr.rel (%p318) target = $region32
        $region31: #{tpu_custom_call.1} parent=11 // pred_region
          _
        $region32: #{tpu_custom_call.1} parent=11 // pred_fallthru
          _
        // Predicated region
        $region33: #{tpu_custom_call.1} parent=11 // pred_check
          %p321 = pneg %p176
        $region34: #{tpu_custom_call.1} parent=11 // pred_check_branch
          %323 = sbr.rel (%p321) target = $region36
        $region35: #{tpu_custom_call.1} parent=11 // pred_region
          _
        $region36: #{tpu_custom_call.1} parent=11 // pred_fallthru
          _
        // Predicated region
        $region37: #{tpu_custom_call.1} parent=11 // pred_check
          %p324 = pneg %p197
        $region38: #{tpu_custom_call.1} parent=11 // pred_check_branch
          %326 = sbr.rel (%p324) target = $region40
        $region39: #{tpu_custom_call.1} parent=11 // pred_region
          _
        $region40: #{tpu_custom_call.1} parent=11 // pred_fallthru
          _
        // Predicated region
        $region41: #{tpu_custom_call.1} parent=11 // pred_check
          %p327 = pneg %p218
        $region42: #{tpu_custom_call.1} parent=11 // pred_check_branch
          %329 = sbr.rel (%p327) target = $region44
        $region43: #{tpu_custom_call.1} parent=11 // pred_region
          _
        $region44: #{tpu_custom_call.1} parent=11 // pred_fallthru
          _
        // Predicated region
        $region45: #{tpu_custom_call.1} parent=11 // pred_check
          %p330 = pneg %p239
        $region46: #{tpu_custom_call.1} parent=11 // pred_check_branch
          %332 = sbr.rel (%p330) target = $region48
        $region47: #{tpu_custom_call.1} parent=11 // pred_region
          _
        $region48: #{tpu_custom_call.1} parent=11 // pred_fallthru
          _
      $region12: #{tpu_custom_call.1} parent=5 // pred_fallthru
        _
      %p333 = scmp.lt.s32.totalorder %s24, 2
      // Predicated region
      $region49: #{tpu_custom_call.1} parent=5 // pred_check
        %p334 = pneg %p333
      $region50: #{tpu_custom_call.1} parent=5 // pred_check_branch
        %336 = sbr.rel (%p334) target = $region52
      $region51: #{tpu_custom_call.1} parent=5 // pred_region
        // Predicated region
        $region53: #{tpu_custom_call.1} parent=51 // pred_check
          %p337 = pneg %p44
        $region54: #{tpu_custom_call.1} parent=51 // pred_check_branch
          %339 = sbr.rel (%p337) target = $region56
        $region55: #{tpu_custom_call.1} parent=51 // pred_region
          %s340 = smul.u32 16, %s24
          %p341 = scmp.lt.s32.totalorder %s340, 31
          %s342 = scalar_select %p341, %s340, 31
          %s343 = smul.addr %s342, 8
          %s344 = scalar_lea.vmem %s0, %s343
          %s345 = smul.u32 16, %s24
        $region56: #{tpu_custom_call.1} parent=51 // pred_fallthru
          _
      $region52: #{tpu_custom_call.1} parent=5 // pred_fallthru
        _
      %p346 = scmp.le.s32.totalorder 1, %s24
      %p347 = scmp.lt.s32.totalorder %s24, 3
      %p348 = pnand %p346, %p347
      %p349 = pneg %p348
      // Predicated region
      $region57: #{tpu_custom_call.1} parent=5 // pred_check
        _
      $region58: #{tpu_custom_call.1} parent=5 // pred_check_branch
        %351 = sbr.rel (%p348) target = $region60
      $region59: #{tpu_custom_call.1} parent=5 // pred_region
        %s352 = ssub.s32 %s24, 1
        %s353 = smul.u32 16, %s29
        %p354 = scmp.lt.s32.totalorder %s353, 31
        %s355 = scalar_select %p354, %s353, 31
        %s356 = smul.addr %s355, 8
        %s357 = scalar_lea.vmem %s0, %s356
        %p358 = pneg %p50
        %p359 = pneg %p47
        %p360 = pneg %p71
        %p361 = pneg %p68
        %p362 = pneg %p92
        %p363 = pneg %p89
        %p364 = pneg %p113
        %p365 = pneg %p110
        %p366 = pneg %p134
        %p367 = pneg %p131
        %p368 = pneg %p155
        %p369 = pneg %p152
        %p370 = pneg %p176
        %p371 = pneg %p173
        %p372 = pneg %p197
        %p373 = pneg %p194
        %p374 = pneg %p218
        %p375 = pneg %p215
        %p376 = pneg %p239
        %p377 = pneg %p236
        %p378 = pneg %p265
        %p379 = pneg %p262
        %s380 = sand.u32 %s252, 1
        %s381 = scalar_lea.sflag [#allocation3], %s380
        %s382 = sand.u32 %s252, 1
        %s383 = smul.addr %s382, 16
        %s384 = scalar_lea.vmem [#allocation2], %s383
        %p385 = pneg %p291
        %p386 = pneg %p288
        %s387 = sand.u32 %s278, 1
        %s388 = scalar_lea.sflag [#allocation5], %s387
        %s389 = sand.u32 %s278, 1
        %s390 = smul.addr %s389, 16
        %s391 = scalar_lea.vmem [#allocation4], %s390
        %s392 = smul.u32 16, %s29
        %p393 = scmp.lt.s32.totalorder %s392, 31
        %s394 = scalar_select %p393, %s392, 31
        %s395 = smul.addr %s394, 8
        %s396 = scalar_lea.vmem %s0, %s395
        %s397 = smul.u32 16, %s29
        %v398 = vld [vmem:[%s396] sm:$0xff]
        %v399 = vld [vmem:[%s396 + $0x8] sm:$0xff]
        %v400 = vld [vmem:[%s396 + $0x10] sm:$0xff]
        %v401 = vld [vmem:[%s396 + $0x18] sm:$0xff]
        %v402 = vld [vmem:[%s396 + $0x20] sm:$0xff]
        %v403 = vld [vmem:[%s396 + $0x28] sm:$0xff]
        %v404 = vld [vmem:[%s396 + $0x30] sm:$0xff]
        %v405 = vld [vmem:[%s396 + $0x38] sm:$0xff]
        %v406 = vld [vmem:[%s396 + $0x40] sm:$0xff]
        %v407 = vld [vmem:[%s396 + $0x48] sm:$0xff]
        %v408 = vld [vmem:[%s396 + $0x50] sm:$0xff]
        %v409 = vld [vmem:[%s396 + $0x58] sm:$0xff]
        %v410 = vld [vmem:[%s396 + $0x60] sm:$0xff]
        %v411 = vld [vmem:[%s396 + $0x68] sm:$0xff]
        %v412 = vld [vmem:[%s396 + $0x70] sm:$0xff]
        %v413 = vld [vmem:[%s396 + $0x78] sm:$0xff]
        %v414 = vld [vmem:[%s1] sm:$0xff]
        %v415 = vld [vmem:[%s1 + $0x8] sm:$0xff]
        %v416 = vld [vmem:[%s1 + $0x10] sm:$0xff]
        %v417 = vld [vmem:[%s1 + $0x18] sm:$0xff]
        %v418 = vld [vmem:[%s2] sm:$0xff]
        %v419 = vld [vmem:[%s2 + $0x8] sm:$0xff]
        %v420 = vld [vmem:[%s2 + $0x10] sm:$0xff]
        %v421 = vld [vmem:[%s2 + $0x18] sm:$0xff]
        %423 = vset.pattern.permute.xlu0 0
        %424 = vperm.xlu0 %423, %v418
        %v425 = vpop.permute.xlu0 %424
        %428 = vset.pattern.permute.xlu0 0
        %429 = vperm.xlu0 %428, %v419
        %v430 = vpop.permute.xlu0 %429
        %433 = vset.pattern.permute.xlu0 0
        %434 = vperm.xlu0 %433, %v420
        %v435 = vpop.permute.xlu0 %434
        %438 = vset.pattern.permute.xlu0 0
        %439 = vperm.xlu0 %438, %v421
        %v440 = vpop.permute.xlu0 %439
        %vm442 = vcmask 130048
        %v444 = vsel %vm442, %v414, 0
        %v447 = vsel %vm442, %v415, 0
        %v450 = vsel %vm442, %v416, 0
        %v453 = vsel %vm442, %v417, 0
        %v456 = vsel %vm442, %v398, 0
        %v459 = vsel %vm442, %v399, 0
        %v462 = vsel %vm442, %v400, 0
        %v465 = vsel %vm442, %v401, 0
        %v468 = vsel %vm442, %v402, 0
        %v471 = vsel %vm442, %v403, 0
        %v474 = vsel %vm442, %v404, 0
        %v477 = vsel %vm442, %v405, 0
        %v480 = vsel %vm442, %v406, 0
        %v483 = vsel %vm442, %v407, 0
        %v486 = vsel %vm442, %v408, 0
        %v489 = vsel %vm442, %v409, 0
        %v492 = vsel %vm442, %v410, 0
        %v495 = vsel %vm442, %v411, 0
        %v498 = vsel %vm442, %v412, 0
        %v501 = vsel %vm442, %v413, 0
        %503 = vmatprep.subr.mxu0 0.0
        %504 = vmatpush1.xpose.msra.mxu0 %v501
        %505 = vmatprep.subr.mxu0 0.0
        %506 = vmatpush1.xpose.msra.mxu0 %v498
        %507 = vmatprep.subr.mxu0 0.0
        %508 = vmatpush1.xpose.msra.mxu0 %v495
        %509 = vmatprep.subr.mxu0 0.0
        %510 = vmatpush1.xpose.msra.mxu0 %v492
        %511 = vmatprep.subr.mxu0 0.0
        %512 = vmatpush1.xpose.msra.mxu0 %v489
        %513 = vmatprep.subr.mxu0 0.0
        %514 = vmatpush1.xpose.msra.mxu0 %v486
        %515 = vmatprep.subr.mxu0 0.0
        %516 = vmatpush1.xpose.msra.mxu0 %v483
        %517 = vmatprep.subr.mxu0 0.0
        %518 = vmatpush1.xpose.msra.mxu0 %v480
        %519 = vmatprep.subr.mxu0 0.0
        %520 = vmatpush1.xpose.msra.mxu0 %v477
        %521 = vmatprep.subr.mxu0 0.0
        %522 = vmatpush1.xpose.msra.mxu0 %v474
        %523 = vmatprep.subr.mxu0 0.0
        %524 = vmatpush1.xpose.msra.mxu0 %v471
        %525 = vmatprep.subr.mxu0 0.0
        %526 = vmatpush1.xpose.msra.mxu0 %v468
        %527 = vmatprep.subr.mxu0 0.0
        %528 = vmatpush1.xpose.msra.mxu0 %v465
        %529 = vmatprep.subr.mxu0 0.0
        %530 = vmatpush1.xpose.msra.mxu0 %v462
        %531 = vmatprep.subr.mxu0 0.0
        %532 = vmatpush1.xpose.msra.mxu0 %v459
        %533 = vmatprep.subr.mxu0 0.0
        %534 = vmatpush1.xpose.msra.mxu0 %v456
        %535 = vmatprep.subr.mxu0 0.0
        %536 = vmatpush2.xpose.msra.mxu0 0.0
        %537 = vmatprep.subr.mxu0 0.0
        %538 = vmatpush2.xpose.msra.mxu0 0.0
        %539 = vmatprep.subr.mxu0 0.0
        %540 = vmatpush2.xpose.msra.mxu0 0.0
        %541 = vmatprep.subr.mxu0 0.0
        %542 = vmatpush2.xpose.msra.mxu0 0.0
        %543 = vmatprep.subr.mxu0 0.0
        %544 = vmatpush2.xpose.msra.mxu0 0.0
        %545 = vmatprep.subr.mxu0 0.0
        %546 = vmatpush2.xpose.msra.mxu0 0.0
        %547 = vmatprep.subr.mxu0 0.0
        %548 = vmatpush2.xpose.msra.mxu0 0.0
        %549 = vmatprep.subr.mxu0 0.0
        %550 = vmatpush2.xpose.msra.mxu0 0.0
        %551 = vmatprep.subr.mxu0 0.0
        %552 = vmatpush2.xpose.msra.mxu0 0.0
        %553 = vmatprep.subr.mxu0 0.0
        %554 = vmatpush2.xpose.msra.mxu0 0.0
        %555 = vmatprep.subr.mxu0 0.0
        %556 = vmatpush2.xpose.msra.mxu0 0.0
        %557 = vmatprep.subr.mxu0 0.0
        %558 = vmatpush2.xpose.msra.mxu0 0.0
        %559 = vmatprep.subr.mxu0 0.0
        %560 = vmatpush2.xpose.msra.mxu0 0.0
        %561 = vmatprep.subr.mxu0 0.0
        %562 = vmatpush2.xpose.msra.mxu0 0.0
        %563 = vmatprep.subr.mxu0 0.0
        %564 = vmatpush2.xpose.msra.mxu0 0.0
        %565 = vmatprep.subr.mxu0 0.0
        %566 = vmatpush2.xpose.msra.mxu0 0.0
        %567 = vmatprep.mubr.f32.mxu0 0.0
        %568 = vmatmul.mubr.f32.gmra.mxu0 %v444
        %v569 = vpop.f32.mrf.mxu0
        %v570 = vadd.f32 %v425, %v569
        %v571 = vpop.f32.mrf.mxu0
        %572 = vmatprep.mubr.f32.mxu0 0.0
        %573 = vmatmul.mubr.f32.gmra.mxu0 %v447
        %v574 = vpop.f32.mrf.mxu0
        %v575 = vadd.f32 %v430, %v574
        %v576 = vpop.f32.mrf.mxu0
        %577 = vmatprep.mubr.f32.mxu0 0.0
        %578 = vmatmul.mubr.f32.gmra.mxu0 %v450
        %v579 = vpop.f32.mrf.mxu0
        %v580 = vadd.f32 %v435, %v579
        %v581 = vpop.f32.mrf.mxu0
        %582 = vmatprep.mubr.f32.mxu0 0.0
        %583 = vmatmul.mubr.f32.gmra.mxu0 %v453
        %v584 = vpop.f32.mrf.mxu0
        %v585 = vadd.f32 %v440, %v584
        %v586 = vpop.f32.mrf.mxu0
        %587 = vdwg.mxu0
        %vm588 = vcmp.ge.f32.partialorder %v570, 0.0
        %vm589 = vcmp.ge.f32.partialorder %v575, 0.0
        %vm590 = vcmp.ge.f32.partialorder %v580, 0.0
        %vm591 = vcmp.ge.f32.partialorder %v585, 0.0
        %v592 = vmul.f32 %v570, 0.01
        %v593 = vmul.f32 %v575, 0.01
        %v594 = vmul.f32 %v580, 0.01
        %v595 = vmul.f32 %v585, 0.01
        %v596 = vsel %vm588, %v570, %v592
        %v597 = vsel %vm589, %v575, %v593
        %v598 = vsel %vm590, %v580, %v594
        %v599 = vsel %vm591, %v585, %v595
        %v600 = vld [vmem:[%s3] sm:$0xff]
        %v601 = vld [vmem:[%s3 + $0x8] sm:$0xff]
        %v602 = vld [vmem:[%s4] sm:$0xff]
        %v603 = vld [vmem:[%s4 + $0x8] sm:$0xff]
        %605 = vset.pattern.permute.xlu0 0
        %606 = vperm.xlu0 %605, %v602
        %v607 = vpop.permute.xlu0 %606
        %610 = vset.pattern.permute.xlu0 0
        %611 = vperm.xlu0 %610, %v603
        %v612 = vpop.permute.xlu0 %611
        %vm614 = vcmask 261120
        %v616 = vsel %vm614, %v600, 0
        %v619 = vsel %vm614, %v601, 0
        %621 = vmatprep.subr.mxu0 0.0
        %622 = vmatpush1.msra.mxu0 0.0
        %623 = vmatprep.subr.mxu0 0.0
        %624 = vmatpush1.msra.mxu0 0.0
        %625 = vmatprep.subr.mxu0 0.0
        %626 = vmatpush1.msra.mxu0 0.0
        %627 = vmatprep.subr.mxu0 0.0
        %628 = vmatpush1.msra.mxu0 0.0
        %629 = vmatprep.subr.mxu0 0.0
        %630 = vmatpush1.msra.mxu0 0.0
        %631 = vmatprep.subr.mxu0 0.0
        %632 = vmatpush1.msra.mxu0 0.0
        %633 = vmatprep.subr.mxu0 0.0
        %634 = vmatpush1.msra.mxu0 0.0
        %635 = vmatprep.subr.mxu0 0.0
        %636 = vmatpush1.msra.mxu0 0.0
        %637 = vmatprep.subr.mxu0 0.0
        %638 = vmatpush1.msra.mxu0 0.0
        %639 = vmatprep.subr.mxu0 0.0
        %640 = vmatpush1.msra.mxu0 0.0
        %641 = vmatprep.subr.mxu0 0.0
        %642 = vmatpush1.msra.mxu0 0.0
        %643 = vmatprep.subr.mxu0 0.0
        %644 = vmatpush1.msra.mxu0 0.0
        %645 = vmatprep.subr.mxu0 0.0
        %646 = vmatpush1.msra.mxu0 %v599
        %647 = vmatprep.subr.mxu0 0.0
        %648 = vmatpush1.msra.mxu0 %v598
        %649 = vmatprep.subr.mxu0 0.0
        %650 = vmatpush1.msra.mxu0 %v597
        %651 = vmatprep.subr.mxu0 0.0
        %652 = vmatpush1.msra.mxu0 %v596
        %653 = vmatprep.subr.mxu0 0.0
        %654 = vmatpush2.msra.mxu0 0.0
        %655 = vmatprep.subr.mxu0 0.0
        %656 = vmatpush2.msra.mxu0 0.0
        %657 = vmatprep.subr.mxu0 0.0
        %658 = vmatpush2.msra.mxu0 0.0
        %659 = vmatprep.subr.mxu0 0.0
        %660 = vmatpush2.msra.mxu0 0.0
        %661 = vmatprep.subr.mxu0 0.0
        %662 = vmatpush2.msra.mxu0 0.0
        %663 = vmatprep.subr.mxu0 0.0
        %664 = vmatpush2.msra.mxu0 0.0
        %665 = vmatprep.subr.mxu0 0.0
        %666 = vmatpush2.msra.mxu0 0.0
        %667 = vmatprep.subr.mxu0 0.0
        %668 = vmatpush2.msra.mxu0 0.0
        %669 = vmatprep.subr.mxu0 0.0
        %670 = vmatpush2.msra.mxu0 0.0
        %671 = vmatprep.subr.mxu0 0.0
        %672 = vmatpush2.msra.mxu0 0.0
        %673 = vmatprep.subr.mxu0 0.0
        %674 = vmatpush2.msra.mxu0 0.0
        %675 = vmatprep.subr.mxu0 0.0
        %676 = vmatpush2.msra.mxu0 0.0
        %677 = vmatprep.subr.mxu0 0.0
        %678 = vmatpush2.msra.mxu0 0.0
        %679 = vmatprep.subr.mxu0 0.0
        %680 = vmatpush2.msra.mxu0 0.0
        %681 = vmatprep.subr.mxu0 0.0
        %682 = vmatpush2.msra.mxu0 0.0
        %683 = vmatprep.subr.mxu0 0.0
        %684 = vmatpush2.msra.mxu0 0.0
        %685 = vmatprep.mubr.f32.mxu0 0.0
        %686 = vmatmul.mubr.f32.gmra.mxu0 %v616
        %v687 = vpop.f32.mrf.mxu0
        %v688 = vadd.f32 %v607, %v687
        %v689 = vpop.f32.mrf.mxu0
        %690 = vmatprep.mubr.f32.mxu0 0.0
        %691 = vmatmul.mubr.f32.gmra.mxu0 %v619
        %v692 = vpop.f32.mrf.mxu0
        %v693 = vadd.f32 %v612, %v692
        %v694 = vpop.f32.mrf.mxu0
        %695 = vdwg.mxu0
        %v696 = vlaneseq
        %v697 = vshrl.u32 %v696, 7
        %v698 = vadd.s32 %v697, 8
        %vm699 = vcmp.ge.s32.totalorder %v697, 0
        %vm700 = vcmp.ge.s32.totalorder %v698, 0
        %vm701 = vcmp.lt.s32.totalorder %v697, 4
        %vm702 = vcmp.lt.s32.totalorder %v698, 4
        %vm703 = vmand %vm699, %vm701
        %vm704 = vmand %vm700, %vm702
        %v705 = vsel %vm703, %v688, -inf
        %v706 = vsel %vm704, %v693, -inf
        %v707 = vmax.f32 %v705, %v706
        %v708 = vrot.slane %v707, 4
        %v709 = vmax.f32 %v707, %v708
        %v710 = vrot.slane %v709, 2
        %v711 = vmax.f32 %v709, %v710
        %v712 = vrot.slane %v711, 1
        %v713 = vmax.f32 %v711, %v712
        %v714 = vsel %vm703, %v713, %v688
        %v715 = vsel %vm704, %v713, %v693
        %vm716 = vcmp.ge.s32.totalorder %v697, 4
        %vm717 = vcmp.ge.s32.totalorder %v698, 4
        %vm718 = vcmp.lt.s32.totalorder %v697, 8
        %vm719 = vcmp.lt.s32.totalorder %v698, 8
        %vm720 = vmand %vm716, %vm718
        %vm721 = vmand %vm717, %vm719
        %v722 = vsel %vm720, %v688, -inf
        %v723 = vsel %vm721, %v693, -inf
        %v724 = vmax.f32 %v722, %v723
        %v725 = vrot.slane %v724, 4
        %v726 = vmax.f32 %v724, %v725
        %v727 = vrot.slane %v726, 2
        %v728 = vmax.f32 %v726, %v727
        %v729 = vrot.slane %v728, 1
        %v730 = vmax.f32 %v728, %v729
        %v731 = vsel %vm720, %v730, %v714
        %v732 = vsel %vm721, %v730, %v715
        %v733 = vsub.f32 %v688, %v731
        %v734 = vsub.f32 %v693, %v732
        %v735 = vmul.f32 %v733, 1.442695
        %v736 = vpow.pop %v735
        %v737 = vmul.f32 %v734, 1.442695
        %v738 = vpow.pop %v737
        %v739 = vsel %vm703, %v736, 0.0
        %v740 = vsel %vm704, %v738, 0.0
        %v741 = vadd.f32 %v739, %v740
        %v742 = vrot.slane %v741, 4
        %v743 = vadd.f32 %v741, %v742
        %v744 = vrot.slane %v743, 2
        %v745 = vadd.f32 %v743, %v744
        %v746 = vrot.slane %v745, 1
        %v747 = vadd.f32 %v745, %v746
        %v748 = vrcp.pop %v747
        %v749 = vmul.f32 1.0, %v748
        %v750 = vsel %vm703, %v749, 1.0
        %v751 = vsel %vm704, %v749, 1.0
        %v752 = vsel %vm720, %v736, 0.0
        %v753 = vsel %vm721, %v738, 0.0
        %v754 = vadd.f32 %v752, %v753
        %v755 = vrot.slane %v754, 4
        %v756 = vadd.f32 %v754, %v755
        %v757 = vrot.slane %v756, 2
        %v758 = vadd.f32 %v756, %v757
        %v759 = vrot.slane %v758, 1
        %v760 = vadd.f32 %v758, %v759
        %v761 = vrcp.pop %v760
        %v762 = vmul.f32 1.0, %v761
        %v763 = vsel %vm720, %v762, %v750
        %v764 = vsel %vm721, %v762, %v751
        %v765 = vmul.f32 %v736, %v763
        %v766 = vmul.f32 %v738, %v764
        %v767 = vtanh.pop %v688
        %v768 = vtanh.pop %v693
        %v769 = vsel %vm718, %v765, %v767
        %v770 = vsel %vm719, %v766, %v768
        %771 = vst [vmem:[%s384] sm:$0xff] %v769
        %772 = vst [vmem:[%s384 + $0x8] sm:$0xff] %v770
        %v773 = vld [vmem:[%s5] sm:$0xff]
        %v774 = vld [vmem:[%s5 + $0x8] sm:$0xff]
        %v775 = vld [vmem:[%s5 + $0x10] sm:$0xff]
        %v776 = vld [vmem:[%s5 + $0x18] sm:$0xff]
        %v777 = vld [vmem:[%s6] sm:$0xff]
        %v778 = vld [vmem:[%s6 + $0x8] sm:$0xff]
        %v779 = vld [vmem:[%s6 + $0x10] sm:$0xff]
        %v780 = vld [vmem:[%s6 + $0x18] sm:$0xff]
        %v782 = vsel %vm442, %v777, 0
        %v785 = vsel %vm442, %v778, 0
        %v788 = vsel %vm442, %v779, 0
        %v791 = vsel %vm442, %v780, 0
        %793 = vmatprep.subr.mxu0 0.0
        %794 = vmatpush1.msra.mxu0 0.0
        %795 = vmatprep.subr.mxu0 0.0
        %796 = vmatpush1.msra.mxu0 0.0
        %797 = vmatprep.subr.mxu0 0.0
        %798 = vmatpush1.msra.mxu0 0.0
        %799 = vmatprep.subr.mxu0 0.0
        %800 = vmatpush1.msra.mxu0 0.0
        %801 = vmatprep.subr.mxu0 0.0
        %802 = vmatpush1.msra.mxu0 0.0
        %803 = vmatprep.subr.mxu0 0.0
        %804 = vmatpush1.msra.mxu0 0.0
        %805 = vmatprep.subr.mxu0 0.0
        %806 = vmatpush1.msra.mxu0 0.0
        %807 = vmatprep.subr.mxu0 0.0
        %808 = vmatpush1.msra.mxu0 0.0
        %809 = vmatprep.subr.mxu0 0.0
        %810 = vmatpush1.msra.mxu0 0.0
        %811 = vmatprep.subr.mxu0 0.0
        %812 = vmatpush1.msra.mxu0 0.0
        %813 = vmatprep.subr.mxu0 0.0
        %814 = vmatpush1.msra.mxu0 0.0
        %815 = vmatprep.subr.mxu0 0.0
        %816 = vmatpush1.msra.mxu0 0.0
        %817 = vmatprep.subr.mxu0 0.0
        %818 = vmatpush1.msra.mxu0 0.0
        %819 = vmatprep.subr.mxu0 0.0
        %820 = vmatpush1.msra.mxu0 0.0
        %821 = vmatprep.subr.mxu0 0.0
        %822 = vmatpush1.msra.mxu0 %v770
        %823 = vmatprep.subr.mxu0 0.0
        %824 = vmatpush1.msra.mxu0 %v769
        %825 = vmatprep.subr.mxu0 0.0
        %826 = vmatpush2.msra.mxu0 0.0
        %827 = vmatprep.subr.mxu0 0.0
        %828 = vmatpush2.msra.mxu0 0.0
        %829 = vmatprep.subr.mxu0 0.0
        %830 = vmatpush2.msra.mxu0 0.0
        %831 = vmatprep.subr.mxu0 0.0
        %832 = vmatpush2.msra.mxu0 0.0
        %833 = vmatprep.subr.mxu0 0.0
        %834 = vmatpush2.msra.mxu0 0.0
        %835 = vmatprep.subr.mxu0 0.0
        %836 = vmatpush2.msra.mxu0 0.0
        %837 = vmatprep.subr.mxu0 0.0
        %838 = vmatpush2.msra.mxu0 0.0
        %839 = vmatprep.subr.mxu0 0.0
        %840 = vmatpush2.msra.mxu0 0.0
        %841 = vmatprep.subr.mxu0 0.0
        %842 = vmatpush2.msra.mxu0 0.0
        %843 = vmatprep.subr.mxu0 0.0
        %844 = vmatpush2.msra.mxu0 0.0
        %845 = vmatprep.subr.mxu0 0.0
        %846 = vmatpush2.msra.mxu0 0.0
        %847 = vmatprep.subr.mxu0 0.0
        %848 = vmatpush2.msra.mxu0 0.0
        %849 = vmatprep.subr.mxu0 0.0
        %850 = vmatpush2.msra.mxu0 0.0
        %851 = vmatprep.subr.mxu0 0.0
        %852 = vmatpush2.msra.mxu0 0.0
        %853 = vmatprep.subr.mxu0 0.0
        %854 = vmatpush2.msra.mxu0 0.0
        %855 = vmatprep.subr.mxu0 0.0
        %856 = vmatpush2.msra.mxu0 0.0
        %857 = vmatprep.mubr.f32.mxu0 0.0
        %858 = vmatmul.mubr.f32.gmra.mxu0 %v782
        %v859 = vpop.f32.mrf.mxu0
        %v860 = vadd.f32 0.0, %v859
        %v861 = vpop.f32.mrf.mxu0
        %862 = vmatprep.mubr.f32.mxu0 0.0
        %863 = vmatmul.mubr.f32.gmra.mxu0 %v785
        %v864 = vpop.f32.mrf.mxu0
        %v865 = vadd.f32 0.0, %v864
        %v866 = vpop.f32.mrf.mxu0
        %867 = vmatprep.mubr.f32.mxu0 0.0
        %868 = vmatmul.mubr.f32.gmra.mxu0 %v788
        %v869 = vpop.f32.mrf.mxu0
        %v870 = vadd.f32 0.0, %v869
        %v871 = vpop.f32.mrf.mxu0
        %872 = vmatprep.mubr.f32.mxu0 0.0
        %873 = vmatmul.mubr.f32.gmra.mxu0 %v791
        %v874 = vpop.f32.mrf.mxu0
        %v875 = vadd.f32 0.0, %v874
        %v876 = vpop.f32.mrf.mxu0
        %877 = vdwg.mxu0
        %v879 = vsel %vm442, %v773, 0
        %v882 = vsel %vm442, %v774, 0
        %v885 = vsel %vm442, %v775, 0
        %v888 = vsel %vm442, %v776, 0
        %890 = vmatprep.subr.mxu0 0.0
        %891 = vmatpush1.xpose.msra.mxu0 %v501
        %892 = vmatprep.subr.mxu0 0.0
        %893 = vmatpush1.xpose.msra.mxu0 %v498
        %894 = vmatprep.subr.mxu0 0.0
        %895 = vmatpush1.xpose.msra.mxu0 %v495
        %896 = vmatprep.subr.mxu0 0.0
        %897 = vmatpush1.xpose.msra.mxu0 %v492
        %898 = vmatprep.subr.mxu0 0.0
        %899 = vmatpush1.xpose.msra.mxu0 %v489
        %900 = vmatprep.subr.mxu0 0.0
        %901 = vmatpush1.xpose.msra.mxu0 %v486
        %902 = vmatprep.subr.mxu0 0.0
        %903 = vmatpush1.xpose.msra.mxu0 %v483
        %904 = vmatprep.subr.mxu0 0.0
        %905 = vmatpush1.xpose.msra.mxu0 %v480
        %906 = vmatprep.subr.mxu0 0.0
        %907 = vmatpush1.xpose.msra.mxu0 %v477
        %908 = vmatprep.subr.mxu0 0.0
        %909 = vmatpush1.xpose.msra.mxu0 %v474
        %910 = vmatprep.subr.mxu0 0.0
        %911 = vmatpush1.xpose.msra.mxu0 %v471
        %912 = vmatprep.subr.mxu0 0.0
        %913 = vmatpush1.xpose.msra.mxu0 %v468
        %914 = vmatprep.subr.mxu0 0.0
        %915 = vmatpush1.xpose.msra.mxu0 %v465
        %916 = vmatprep.subr.mxu0 0.0
        %917 = vmatpush1.xpose.msra.mxu0 %v462
        %918 = vmatprep.subr.mxu0 0.0
        %919 = vmatpush1.xpose.msra.mxu0 %v459
        %920 = vmatprep.subr.mxu0 0.0
        %921 = vmatpush1.xpose.msra.mxu0 %v456
        %922 = vmatprep.subr.mxu0 0.0
        %923 = vmatpush2.xpose.msra.mxu0 0.0
        %924 = vmatprep.subr.mxu0 0.0
        %925 = vmatpush2.xpose.msra.mxu0 0.0
        %926 = vmatprep.subr.mxu0 0.0
        %927 = vmatpush2.xpose.msra.mxu0 0.0
        %928 = vmatprep.subr.mxu0 0.0
        %929 = vmatpush2.xpose.msra.mxu0 0.0
        %930 = vmatprep.subr.mxu0 0.0
        %931 = vmatpush2.xpose.msra.mxu0 0.0
        %932 = vmatprep.subr.mxu0 0.0
        %933 = vmatpush2.xpose.msra.mxu0 0.0
        %934 = vmatprep.subr.mxu0 0.0
        %935 = vmatpush2.xpose.msra.mxu0 0.0
        %936 = vmatprep.subr.mxu0 0.0
        %937 = vmatpush2.xpose.msra.mxu0 0.0
        %938 = vmatprep.subr.mxu0 0.0
        %939 = vmatpush2.xpose.msra.mxu0 0.0
        %940 = vmatprep.subr.mxu0 0.0
        %941 = vmatpush2.xpose.msra.mxu0 0.0
        %942 = vmatprep.subr.mxu0 0.0
        %943 = vmatpush2.xpose.msra.mxu0 0.0
        %944 = vmatprep.subr.mxu0 0.0
        %945 = vmatpush2.xpose.msra.mxu0 0.0
        %946 = vmatprep.subr.mxu0 0.0
        %947 = vmatpush2.xpose.msra.mxu0 0.0
        %948 = vmatprep.subr.mxu0 0.0
        %949 = vmatpush2.xpose.msra.mxu0 0.0
        %950 = vmatprep.subr.mxu0 0.0
        %951 = vmatpush2.xpose.msra.mxu0 0.0
        %952 = vmatprep.subr.mxu0 0.0
        %953 = vmatpush2.xpose.msra.mxu0 0.0
        %954 = vmatprep.mubr.f32.mxu0 0.0
        %955 = vmatmul.mubr.f32.gmra.mxu0 %v879
        %v956 = vpop.f32.mrf.mxu0
        %v957 = vadd.f32 %v860, %v956
        %v958 = vpop.f32.mrf.mxu0
        %959 = vmatprep.mubr.f32.mxu0 0.0
        %960 = vmatmul.mubr.f32.gmra.mxu0 %v882
        %v961 = vpop.f32.mrf.mxu0
        %v962 = vadd.f32 %v865, %v961
        %v963 = vpop.f32.mrf.mxu0
        %964 = vmatprep.mubr.f32.mxu0 0.0
        %965 = vmatmul.mubr.f32.gmra.mxu0 %v885
        %v966 = vpop.f32.mrf.mxu0
        %v967 = vadd.f32 %v870, %v966
        %v968 = vpop.f32.mrf.mxu0
        %969 = vmatprep.mubr.f32.mxu0 0.0
        %970 = vmatmul.mubr.f32.gmra.mxu0 %v888
        %v971 = vpop.f32.mrf.mxu0
        %v972 = vadd.f32 %v875, %v971
        %v973 = vpop.f32.mrf.mxu0
        %974 = vdwg.mxu0
        %v975 = vld [vmem:[%s7] sm:$0xff]
        %v976 = vld [vmem:[%s7 + $0x8] sm:$0xff]
        %v977 = vld [vmem:[%s7 + $0x10] sm:$0xff]
        %v978 = vld [vmem:[%s7 + $0x18] sm:$0xff]
        %980 = vset.pattern.permute.xlu0 0
        %981 = vperm.xlu0 %980, %v975
        %v982 = vpop.permute.xlu0 %981
        %985 = vset.pattern.permute.xlu0 0
        %986 = vperm.xlu0 %985, %v976
        %v987 = vpop.permute.xlu0 %986
        %990 = vset.pattern.permute.xlu0 0
        %991 = vperm.xlu0 %990, %v977
        %v992 = vpop.permute.xlu0 %991
        %995 = vset.pattern.permute.xlu0 0
        %996 = vperm.xlu0 %995, %v978
        %v997 = vpop.permute.xlu0 %996
        %v999 = vadd.f32 %v957, %v982
        %v1000 = vadd.f32 %v962, %v987
        %v1001 = vadd.f32 %v967, %v992
        %v1002 = vadd.f32 %v972, %v997
        %vm1003 = vcmp.ge.f32.partialorder %v999, 0.0
        %vm1004 = vcmp.ge.f32.partialorder %v1000, 0.0
        %vm1005 = vcmp.ge.f32.partialorder %v1001, 0.0
        %vm1006 = vcmp.ge.f32.partialorder %v1002, 0.0
        %v1007 = vmul.f32 %v999, 0.01
        %v1008 = vmul.f32 %v1000, 0.01
        %v1009 = vmul.f32 %v1001, 0.01
        %v1010 = vmul.f32 %v1002, 0.01
        %v1011 = vsel %vm1003, %v999, %v1007
        %v1012 = vsel %vm1004, %v1000, %v1008
        %v1013 = vsel %vm1005, %v1001, %v1009
        %v1014 = vsel %vm1006, %v1002, %v1010
        %v1015 = vld [vmem:[%s8] sm:$0xff]
        %v1016 = vld [vmem:[%s8 + $0x8] sm:$0xff]
        %v1017 = vld [vmem:[%s9] sm:$0xff]
        %v1018 = vld [vmem:[%s9 + $0x8] sm:$0xff]
        %1020 = vset.pattern.permute.xlu0 0
        %1021 = vperm.xlu0 %1020, %v1017
        %v1022 = vpop.permute.xlu0 %1021
        %1025 = vset.pattern.permute.xlu0 0
        %1026 = vperm.xlu0 %1025, %v1018
        %v1027 = vpop.permute.xlu0 %1026
        %v1030 = vsel %vm614, %v1015, 0
        %v1033 = vsel %vm614, %v1016, 0
        %1035 = vmatprep.subr.mxu0 0.0
        %1036 = vmatpush1.msra.mxu0 0.0
        %1037 = vmatprep.subr.mxu0 0.0
        %1038 = vmatpush1.msra.mxu0 0.0
        %1039 = vmatprep.subr.mxu0 0.0
        %1040 = vmatpush1.msra.mxu0 0.0
        %1041 = vmatprep.subr.mxu0 0.0
        %1042 = vmatpush1.msra.mxu0 0.0
        %1043 = vmatprep.subr.mxu0 0.0
        %1044 = vmatpush1.msra.mxu0 0.0
        %1045 = vmatprep.subr.mxu0 0.0
        %1046 = vmatpush1.msra.mxu0 0.0
        %1047 = vmatprep.subr.mxu0 0.0
        %1048 = vmatpush1.msra.mxu0 0.0
        %1049 = vmatprep.subr.mxu0 0.0
        %1050 = vmatpush1.msra.mxu0 0.0
        %1051 = vmatprep.subr.mxu0 0.0
        %1052 = vmatpush1.msra.mxu0 0.0
        %1053 = vmatprep.subr.mxu0 0.0
        %1054 = vmatpush1.msra.mxu0 0.0
        %1055 = vmatprep.subr.mxu0 0.0
        %1056 = vmatpush1.msra.mxu0 0.0
        %1057 = vmatprep.subr.mxu0 0.0
        %1058 = vmatpush1.msra.mxu0 0.0
        %1059 = vmatprep.subr.mxu0 0.0
        %1060 = vmatpush1.msra.mxu0 %v1014
        %1061 = vmatprep.subr.mxu0 0.0
        %1062 = vmatpush1.msra.mxu0 %v1013
        %1063 = vmatprep.subr.mxu0 0.0
        %1064 = vmatpush1.msra.mxu0 %v1012
        %1065 = vmatprep.subr.mxu0 0.0
        %1066 = vmatpush1.msra.mxu0 %v1011
        %1067 = vmatprep.subr.mxu0 0.0
        %1068 = vmatpush2.msra.mxu0 0.0
        %1069 = vmatprep.subr.mxu0 0.0
        %1070 = vmatpush2.msra.mxu0 0.0
        %1071 = vmatprep.subr.mxu0 0.0
        %1072 = vmatpush2.msra.mxu0 0.0
        %1073 = vmatprep.subr.mxu0 0.0
        %1074 = vmatpush2.msra.mxu0 0.0
        %1075 = vmatprep.subr.mxu0 0.0
        %1076 = vmatpush2.msra.mxu0 0.0
        %1077 = vmatprep.subr.mxu0 0.0
        %1078 = vmatpush2.msra.mxu0 0.0
        %1079 = vmatprep.subr.mxu0 0.0
        %1080 = vmatpush2.msra.mxu0 0.0
        %1081 = vmatprep.subr.mxu0 0.0
        %1082 = vmatpush2.msra.mxu0 0.0
        %1083 = vmatprep.subr.mxu0 0.0
        %1084 = vmatpush2.msra.mxu0 0.0
        %1085 = vmatprep.subr.mxu0 0.0
        %1086 = vmatpush2.msra.mxu0 0.0
        %1087 = vmatprep.subr.mxu0 0.0
        %1088 = vmatpush2.msra.mxu0 0.0
        %1089 = vmatprep.subr.mxu0 0.0
        %1090 = vmatpush2.msra.mxu0 0.0
        %1091 = vmatprep.subr.mxu0 0.0
        %1092 = vmatpush2.msra.mxu0 0.0
        %1093 = vmatprep.subr.mxu0 0.0
        %1094 = vmatpush2.msra.mxu0 0.0
        %1095 = vmatprep.subr.mxu0 0.0
        %1096 = vmatpush2.msra.mxu0 0.0
        %1097 = vmatprep.subr.mxu0 0.0
        %1098 = vmatpush2.msra.mxu0 0.0
        %1099 = vmatprep.mubr.f32.mxu0 0.0
        %1100 = vmatmul.mubr.f32.gmra.mxu0 %v1030
        %v1101 = vpop.f32.mrf.mxu0
        %v1102 = vadd.f32 %v1022, %v1101
        %v1103 = vpop.f32.mrf.mxu0
        %1104 = vmatprep.mubr.f32.mxu0 0.0
        %1105 = vmatmul.mubr.f32.gmra.mxu0 %v1033
        %v1106 = vpop.f32.mrf.mxu0
        %v1107 = vadd.f32 %v1027, %v1106
        %v1108 = vpop.f32.mrf.mxu0
        %1109 = vdwg.mxu0
        %vm1110 = vcmp.lt.s32.totalorder %v697, 5
        %vm1111 = vcmp.lt.s32.totalorder %v698, 5
        %vm1112 = vmand %vm699, %vm1110
        %vm1113 = vmand %vm700, %vm1111
        %v1114 = vsel %vm1112, %v1102, -inf
        %v1115 = vsel %vm1113, %v1107, -inf
        %v1116 = vmax.f32 %v1114, %v1115
        %v1117 = vrot.slane %v1116, 4
        %v1118 = vmax.f32 %v1116, %v1117
        %v1119 = vrot.slane %v1118, 2
        %v1120 = vmax.f32 %v1118, %v1119
        %v1121 = vrot.slane %v1120, 1
        %v1122 = vmax.f32 %v1120, %v1121
        %v1123 = vsel %vm1112, %v1122, %v1102
        %v1124 = vsel %vm1113, %v1122, %v1107
        %vm1125 = vcmp.ge.s32.totalorder %v697, 5
        %vm1126 = vcmp.ge.s32.totalorder %v698, 5
        %vm1127 = vmand %vm1125, %vm718
        %vm1128 = vmand %vm1126, %vm719
        %v1129 = vsel %vm1127, %v1102, -inf
        %v1130 = vsel %vm1128, %v1107, -inf
        %v1131 = vmax.f32 %v1129, %v1130
        %v1132 = vrot.slane %v1131, 4
        %v1133 = vmax.f32 %v1131, %v1132
        %v1134 = vrot.slane %v1133, 2
        %v1135 = vmax.f32 %v1133, %v1134
        %v1136 = vrot.slane %v1135, 1
        %v1137 = vmax.f32 %v1135, %v1136
        %v1138 = vsel %vm1127, %v1137, %v1123
        %v1139 = vsel %vm1128, %v1137, %v1124
        %v1140 = vsub.f32 %v1102, %v1138
        %v1141 = vsub.f32 %v1107, %v1139
        %v1142 = vmul.f32 %v1140, 1.442695
        %v1143 = vpow.pop %v1142
        %v1144 = vmul.f32 %v1141, 1.442695
        %v1145 = vpow.pop %v1144
        %v1146 = vsel %vm1112, %v1143, 0.0
        %v1147 = vsel %vm1113, %v1145, 0.0
        %v1148 = vadd.f32 %v1146, %v1147
        %v1149 = vrot.slane %v1148, 4
        %v1150 = vadd.f32 %v1148, %v1149
        %v1151 = vrot.slane %v1150, 2
        %v1152 = vadd.f32 %v1150, %v1151
        %v1153 = vrot.slane %v1152, 1
        %v1154 = vadd.f32 %v1152, %v1153
        %v1155 = vrcp.pop %v1154
        %v1156 = vmul.f32 1.0, %v1155
        %v1157 = vsel %vm1112, %v1156, 1.0
        %v1158 = vsel %vm1113, %v1156, 1.0
        %v1159 = vsel %vm1127, %v1143, 0.0
        %v1160 = vsel %vm1128, %v1145, 0.0
        %v1161 = vadd.f32 %v1159, %v1160
        %v1162 = vrot.slane %v1161, 4
        %v1163 = vadd.f32 %v1161, %v1162
        %v1164 = vrot.slane %v1163, 2
        %v1165 = vadd.f32 %v1163, %v1164
        %v1166 = vrot.slane %v1165, 1
        %v1167 = vadd.f32 %v1165, %v1166
        %v1168 = vrcp.pop %v1167
        %v1169 = vmul.f32 1.0, %v1168
        %v1170 = vsel %vm1127, %v1169, %v1157
        %v1171 = vsel %vm1128, %v1169, %v1158
        %v1172 = vmul.f32 %v1143, %v1170
        %v1173 = vmul.f32 %v1145, %v1171
        %v1174 = vtanh.pop %v1102
        %v1175 = vtanh.pop %v1107
        %v1176 = vsel %vm718, %v1172, %v1174
        %v1177 = vsel %vm719, %v1173, %v1175
        %1178 = vst [vmem:[%s391] sm:$0xff] %v1176
        %1179 = vst [vmem:[%s391 + $0x8] sm:$0xff] %v1177
        %s1180 = sand.u32 %s252, 1
        %s1181 = scalar_lea.sflag [#allocation3], %s1180
        %s1182 = sand.u32 %s252, 1
        %s1183 = smul.addr %s1182, 16
        %s1184 = scalar_lea.vmem [#allocation2], %s1183
        %s1185 = sand.u32 %s278, 1
        %s1186 = scalar_lea.sflag [#allocation5], %s1185
        %s1187 = sand.u32 %s278, 1
        %s1188 = smul.addr %s1187, 16
        %s1189 = scalar_lea.vmem [#allocation4], %s1188
        // Predicated region
        $region61: #{tpu_custom_call.1} parent=59 // pred_check
          %p1190 = pneg %p262
        $region62: #{tpu_custom_call.1} parent=59 // pred_check_branch
          %1192 = sbr.rel (%p1190) target = $region64
        $region63: #{tpu_custom_call.1} parent=59 // pred_region
          %s1194 = ssub.s32 256, 256
          %1195 = vsyncadd %s1181, %s1194
          %s1196 = smul.addr %s29, 128
          %s1197 = scalar_lea.hbm %s10, %s1196
          %s1198 = sshll.u32 %s1184, 4
          %s1199 = int_to_ptr.vmem [resolvable:$true] %s1198
          %1204 = dma.vmem_to_hbm [thread:$0]  %s1199, 256, %s1197, %s1181, 128, 256, 8
        $region64: #{tpu_custom_call.1} parent=59 // pred_fallthru
          _
        // Predicated region
        $region65: #{tpu_custom_call.1} parent=59 // pred_check
          %p1205 = pneg %p288
        $region66: #{tpu_custom_call.1} parent=59 // pred_check_branch
          %1207 = sbr.rel (%p1205) target = $region68
        $region67: #{tpu_custom_call.1} parent=59 // pred_region
          %s1209 = ssub.s32 256, 256
          %1210 = vsyncadd %s1186, %s1209
          %s1211 = smul.addr %s29, 128
          %s1212 = scalar_lea.hbm %s11, %s1211
          %s1213 = sshll.u32 %s1189, 4
          %s1214 = int_to_ptr.vmem [resolvable:$true] %s1213
          %1219 = dma.vmem_to_hbm [thread:$0]  %s1214, 256, %s1212, %s1186, 128, 256, 8
        $region68: #{tpu_custom_call.1} parent=59 // pred_fallthru
          _
      $region60: #{tpu_custom_call.1} parent=5 // pred_fallthru
        _
      %p1220 = scmp.le.s32.totalorder 2, %s24
      // Predicated region
      $region69: #{tpu_custom_call.1} parent=5 // pred_check
        %p1221 = pneg %p1220
      $region70: #{tpu_custom_call.1} parent=5 // pred_check_branch
        %1223 = sbr.rel (%p1221) target = $region72
      $region71: #{tpu_custom_call.1} parent=5 // pred_region
        %s1224 = ssub.s32 %s24, 2
        // Predicated region
        $region73: #{tpu_custom_call.1} parent=71 // pred_check
          %p1225 = pneg %p268
        $region74: #{tpu_custom_call.1} parent=71 // pred_check_branch
          %1227 = sbr.rel (%p1225) target = $region76
        $region75: #{tpu_custom_call.1} parent=71 // pred_region
          %s1228 = sand.u32 %s253, 1
          %s1229 = scalar_lea.sflag [#allocation3], %s1228
          %s1230 = sand.u32 %s253, 1
          %s1231 = smul.addr %s1230, 16
          %s1232 = scalar_lea.vmem [#allocation2], %s1231
          %1233 = dma.done %s1229, 256
        $region76: #{tpu_custom_call.1} parent=71 // pred_fallthru
          _
        // Predicated region
        $region77: #{tpu_custom_call.1} parent=71 // pred_check
          %p1234 = pneg %p294
        $region78: #{tpu_custom_call.1} parent=71 // pred_check_branch
          %1236 = sbr.rel (%p1234) target = $region80
        $region79: #{tpu_custom_call.1} parent=71 // pred_region
          %s1237 = sand.u32 %s279, 1
          %s1238 = scalar_lea.sflag [#allocation5], %s1237
          %s1239 = sand.u32 %s279, 1
          %s1240 = smul.addr %s1239, 16
          %s1241 = scalar_lea.vmem [#allocation4], %s1240
          %1242 = dma.done %s1238, 256
        $region80: #{tpu_custom_call.1} parent=71 // pred_fallthru
          _
      $region72: #{tpu_custom_call.1} parent=5 // pred_fallthru
        _
    $region6: #{tpu_custom_call.1} parent=1 // loop_footer
      %s28 = sadd.s32 1, %s24
    $region7: #{tpu_custom_call.1} parent=1 // loop_footer_branch
      %23 = sbr.rel target = $region3
    $region8: #{tpu_custom_call.1} parent=1 // loop_exit
      _
    %1243 = vsyncpa [#allocation3], 1
    %s1244 = scalar_lea.sflag [#allocation3], 1
    %1245 = vsyncpa %s1244, 1
    %1246 = vsyncpa [#allocation5], 1
    %s1247 = scalar_lea.sflag [#allocation5], 1
    %1248 = vsyncpa %s1247, 1

</llo_original>
